<compile_context>
chip_gen: v5e
topology: v5e:2x2
jax: 0.10.0
libtpu: 0.0.40
codegen_flags: <defaults>
</compile_context>

<pallas_src>
import numpy as np
import jax
import jax.numpy as jnp
from jax import lax
from jax.experimental import pallas as pl
from jax.experimental.pallas import tpu as pltpu

# ----------------------------- model hyper-params (small, synthetic) -----------
VOCAB = 16
N_FEATURES = 4
D_MODEL_IN = 32
N_HEADS = 4
N_LAYERS = 2
MAX_LEN = 32
B = 2
S = 8

# d_model = d_model // n_features // n_heads * n_features * n_heads
D = (D_MODEL_IN // N_FEATURES // N_HEADS) * N_FEATURES * N_HEADS   # 32
FEAT_DIM = D // N_FEATURES                                         # 8
D_HEAD = D // N_HEADS                                              # 8
D_INNER = 64                                                       # synthetic (see TODO above)
D_HALF = D // 2                                                    # 16
BS = B * S                                                         # 16
NCOLS = B * N_HEADS * 2 * S                                        # 128 packed attn columns
OUT_PAD = 128                                                      # lane-dense output slab width
SCALE = 1.0 / float(np.sqrt(D_HEAD))

HI = lax.Precision.HIGHEST
NT = (((1,), (1,)), ((), ()))     # A @ B.T contraction dims


# ----------------------------- shared math helpers ------------------------------
def _ln(x, g, b, eps):
    mu = jnp.mean(x, axis=-1, keepdims=True)
    var = jnp.mean(jnp.square(x - mu), axis=-1, keepdims=True)
    return (x - mu) * lax.rsqrt(var + eps) * g + b


def _gelu(x):
    # erf-based GELU (HF XLNet ff_activation="gelu")
    return 0.5 * x * (1.0 + lax.erf(x * (1.0 / np.sqrt(2.0))))


def rel_pos_encoding(seq_len, d_model):
    """XLNet sinusoidal relative positional encoding, pos_seq = [klen, ..., -qlen+1]."""
    freq = jnp.arange(0, d_model, 2.0, dtype=jnp.float32)
    inv_freq = 1.0 / (10000.0 ** (freq / d_model))
    pos_seq = jnp.arange(seq_len, -seq_len, -1.0, dtype=jnp.float32)   # (2S,)
    sin_inp = pos_seq[:, None] * inv_freq[None, :]
    return jnp.concatenate([jnp.sin(sin_inp), jnp.cos(sin_inp)], axis=-1)  # (2S, D)


# ----------------------------- packed-attention constants ------------------------
# Column c of the packed score matrix encodes (b_c, h_c, j_c):
#   b_c = c // (H*2S), h_c = (c // 2S) % H, j_c = c % 2S    (NCOLS = B*H*2S = 128)
# Row r of the activations encodes (b_r, i_r): b_r = r // S, i_r = r % S.
def _attn_constants():
    cols = np.arange(NCOLS)
    b_c = cols // (N_HEADS * 2 * S)
    h_c = (cols // (2 * S)) % N_HEADS
    j_c = cols % (2 * S)
    rows = np.arange(BS)
    b_r = rows // S
    i_r = rows % S
    d = np.arange(D)
    head_d = d // D_HEAD

    # scatter k/v rows into the packed column layout: (NCOLS, BS) 0/1 matrix
    pv = ((b_c[:, None] == b_r[None, :]) &
          (j_c[:, None] == i_r[None, :]) &
          (j_c[:, None] < S)).astype(np.float32)
    # head mask over the feature lanes: (NCOLS, D)
    mv = (h_c[:, None] == head_d[None, :]).astype(np.float32)
    # same-group (same (b,h) block of 2S columns) indicator for the softmax denom
    gmat = ((cols[:, None] // (2 * S)) ==
            (cols[None, :] // (2 * S))).astype(np.float32)          # (NCOLS, NCOLS)
    # additive score mask: 0 on (own batch, j < S) columns, -1e30 elsewhere
    neg = np.where((b_r[:, None] == b_c[None, :]) & (j_c[None, :] < S),
                   0.0, -1e30).astype(np.float32)                   # (BS, NCOLS)
    # (D, NCOLS) head mask used to build the packed relative keys on the host
    head_mask_dc = (head_d[:, None] == h_c[None, :]).astype(np.float32)
    return pv, mv, gmat, neg, head_mask_dc, j_c


_PV, _MV, _GMAT, _NEG, _HEADMASK_DC, _JC = _attn_constants()


# ----------------------------- Pallas kernel ------------------------------------
def xlnet_kernel(
    x_ref, neg_ref, pv_ref, mv_ref, g_ref,
    krbig_ref, rrbkr_ref, rwb_ref,
    wq_ref, wk_ref, wv_ref, wot_ref,
    ln1g_ref, ln1b_ref, w1_ref, b1_ref, w2_ref, b2_ref, ln2g_ref, ln2b_ref,
    wh1_ref, bh1_ref, lnrg_ref, lnrb_ref, wf_ref, bf_ref,
    out_ref,
):
    h = x_ref[...]            # (BS, D)
    neg = neg_ref[...]        # (BS, NCOLS)
    pv = pv_ref[...]          # (NCOLS, BS)
    mv = mv_ref[...]          # (NCOLS, D)
    gmat = g_ref[...]         # (NCOLS, NCOLS)

    for l in range(N_LAYERS):          # unrolled; weights stay resident in VMEM
        # content projections (wq pre-scaled by 1/sqrt(d_head) on the host)
        q = jnp.dot(h, wq_ref[l], preferred_element_type=jnp.float32)   # (BS, D)
        k = jnp.dot(h, wk_ref[l], preferred_element_type=jnp.float32)
        v = jnp.dot(h, wv_ref[l], preferred_element_type=jnp.float32)

        # scatter keys / values into the packed block-diagonal (batch, head) layout
        k_big = jnp.dot(pv, k, preferred_element_type=jnp.float32) * mv   # (NCOLS, D)
        v_big = jnp.dot(pv, v, preferred_element_type=jnp.float32) * mv   # (NCOLS, D)

        # content score: (q + r_w_bias) @ K^T    (bias pre-scaled on host)
        q_c = q + rwb_ref[l]
        ac = lax.dot_general(q_c, k_big, NT,
                             preferred_element_type=jnp.float32)          # (BS, NCOLS)

        # position score: q @ (packed, head-masked r@W_r) + const bias term
        bd = jnp.dot(q, krbig_ref[l],
                     preferred_element_type=jnp.float32) + rrbkr_ref[l]   # (BS, NCOLS)

        # XLNet rel_shift: within every 2S-lane group, row i fetches lane j + S - i.
        # One strided lane-rotate per batch half (row index restarts at 0 per half).
        shift = NCOLS - S
        bd_s = jnp.concatenate(
            [pltpu.roll(bd[bi * S:(bi + 1) * S, :], shift=shift, axis=1,
                        stride=1, stride_axis=0)
             for bi in range(B)], axis=0)                                  # (BS, NCOLS)

        # masked softmax per (row, head-group);  cross-batch / pad columns -> 0
        score = ac + bd_s + neg
        score = score - jnp.max(score, axis=-1, keepdims=True)
        p = jnp.exp(score)
        denom = jnp.dot(p, gmat, preferred_element_type=jnp.float32) + 1e-30
        prob = p * pl.reciprocal(denom, approx=True)

        av = jnp.dot(prob, v_big, preferred_element_type=jnp.float32)     # (BS, D)
        attn_out = jnp.dot(av, wot_ref[l], preferred_element_type=jnp.float32)

        # post-attention residual + layernorm (eps 1e-12)
        h1 = _ln(h + attn_out, ln1g_ref[l], ln1b_ref[l], 1e-12)

        # XLNet feed-forward (GELU), layernorm eps 1e-12
        u = jnp.dot(h1, w1_ref[l], preferred_element_type=jnp.float32) + b1_ref[l]
        ff = jnp.dot(_gelu(u), w2_ref[l], preferred_element_type=jnp.float32) + b2_ref[l]
        h = _ln(ff + h1, ln2g_ref[l], ln2b_ref[l], 1e-12)

    # heads, fused & lane-padded:
    #   slab1 = h @ [wr1 | wc | 0]  ->  lanes 0:16 = recon-head hidden, 16:18 = logits
    slab1 = jnp.dot(h, wh1_ref[...], preferred_element_type=jnp.float32) + bh1_ref[...]
    r1 = slab1[:, :D_HALF]                                 # (BS, D_HALF)
    logits = slab1[:, D_HALF:D_HALF + 2]                   # (BS, 2)
    r1 = jnp.maximum(_ln(r1, lnrg_ref[...], lnrb_ref[...], 1e-5), 0.0)

    # final fused matmul: [relu(LN(r1)) | logits] @ W_final -> (BS, 128) slab with
    # recon in lanes 0:N_FEATURES, logits routed to lanes N_FEATURES:N_FEATURES+2.
    combined = jnp.concatenate([r1, logits], axis=-1)       # (BS, D_HALF + 2)
    out_ref[...] = (jnp.dot(combined, wf_ref[...], preferred_element_type=jnp.float32)
                    + bf_ref[...])                          # (BS, OUT_PAD) unmasked store


# ----------------------------- host glue / wrapper -------------------------------
def embed(x_tokens, params):
    # TODO(synk): embedding gather stays in the XLA wrapper (tiny table lookup,
    #             no clean/profitable Pallas equivalent at this size).
    embs = [jnp.take(params["tok_emb"][i], x_tokens[:, :, i], axis=0)
            for i in range(N_FEATURES)]
    xe = jnp.concatenate(embs, axis=-1)                 # (B, S, D)
    return xe + params["pos_emb"][:, :S, :]


@jax.jit
def pallas_forward(x_tokens, params):
    L = N_LAYERS
    x_emb = embed(x_tokens, params).reshape(BS, D).astype(jnp.float32)
    r = rel_pos_encoding(S, D).astype(jnp.float32)      # (2S, D)

    # one-time weight packing: fold the softmax scale into wq / r_w_bias / r_r_bias,
    # pre-project the constant relative positional keys into the packed layout.
    wq_s = params["wq"].reshape(L, D, D) * SCALE
    wk = params["wk"].reshape(L, D, D)
    wv = params["wv"].reshape(L, D, D)
    wot = params["wo"].transpose(0, 2, 3, 1).reshape(L, D, D)
    rwb_s = params["rwb"].reshape(L, 1, D) * SCALE
    rrb_s = params["rrb"].reshape(L, 1, D) * SCALE

    wr = params["wr"].reshape(L, D, D)
    kr = jnp.einsum("sd,ldf->lsf", r, wr, precision=HI)                 # (L, 2S, D)
    krbig = jnp.swapaxes(kr, 1, 2)[:, :, _JC] * _HEADMASK_DC[None]      # (L, D, NCOLS)
    rrbkr = jnp.matmul(rrb_s, krbig, precision=HI)                      # (L, 1, NCOLS)

    # head packing: one lane-padded (D, 128) matrix carrying the reconstruction-head
    # first Linear (cols 0:D_HALF) and the classification head (cols D_HALF:D_HALF+2).
    w_head1 = jnp.zeros((D, OUT_PAD), jnp.float32)
    w_head1 = w_head1.at[:, :D_HALF].set(params["wr1"])
    w_head1 = w_head1.at[:, D_HALF:D_HALF + 2].set(params["wc"])
    b_head1 = jnp.zeros((1, OUT_PAD), jnp.float32)
    b_head1 = b_head1.at[:, :D_HALF].set(params["br1"])
    b_head1 = b_head1.at[:, D_HALF:D_HALF + 2].set(params["bc"])

    # final packed matrix: rows 0:D_HALF = wr2 -> output lanes 0:N_FEATURES,
    # rows D_HALF:D_HALF+2 = identity routing of the logits -> lanes N_FEATURES:+2.
    w_final = jnp.zeros((D_HALF + 2, OUT_PAD), jnp.float32)
    w_final = w_final.at[:D_HALF, :N_FEATURES].set(params["wr2"])
    w_final = w_final.at[D_HALF:, N_FEATURES:N_FEATURES + 2].set(
        jnp.eye(2, dtype=jnp.float32))
    b_final = jnp.zeros((1, OUT_PAD), jnp.float32)
    b_final = b_final.at[:, :N_FEATURES].set(params["br2"])

    operands = (
        x_emb,
        jnp.asarray(_NEG), jnp.asarray(_PV), jnp.asarray(_MV), jnp.asarray(_GMAT),
        krbig, rrbkr, rwb_s,
        wq_s, wk, wv, wot,
        params["ln1g"].reshape(L, 1, D), params["ln1b"].reshape(L, 1, D),
        params["w1"], params["b1"].reshape(L, 1, D_INNER),
        params["w2"], params["b2"].reshape(L, 1, D),
        params["ln2g"].reshape(L, 1, D), params["ln2b"].reshape(L, 1, D),
        w_head1, b_head1, params["lnrg"], params["lnrb"], w_final, b_final,
    )

    out = pl.pallas_call(
        xlnet_kernel,
        out_shape=jax.ShapeDtypeStruct((BS, OUT_PAD), jnp.float32),
        in_specs=[pl.BlockSpec(memory_space=pltpu.MemorySpace.VMEM)] * len(operands),
        out_specs=pl.BlockSpec(memory_space=pltpu.MemorySpace.VMEM),
    )(*operands)

    recon = out[:, :N_FEATURES].reshape(B, S, N_FEATURES)
    logits = out[:, N_FEATURES:N_FEATURES + 2].reshape(B, S, 2)
    return recon, logits


# ----------------------------- pure-JAX reference (correctness check) ------------
def _rel_shift_bnij(x, klen):
    b, n, i, j = x.shape
    x = x.reshape(b, n, j, i)[:, :, 1:, :].reshape(b, n, i, j - 1)
    return x[:, :, :, :klen]


def ref_forward(x_tokens, params):
    h = embed(x_tokens, params)                         # (B, S, D)
    r = rel_pos_encoding(S, D)                          # (2S, D)
    scale = 1.0 / (D_HEAD ** 0.5)
    for l in range(N_LAYERS):
        q = jnp.einsum("bih,hnd->bind", h, params["wq"][l], precision=HI)
        k = jnp.einsum("bjh,hnd->bjnd", h, params["wk"][l], precision=HI)
        v = jnp.einsum("bjh,hnd->bjnd", h, params["wv"][l], precision=HI)
        kr = jnp.einsum("jh,hnd->jnd", r, params["wr"][l], precision=HI)
        ac = jnp.einsum("bind,bjnd->bnij", q + params["rwb"][l], k, precision=HI)
        bd = jnp.einsum("bind,jnd->bnij", q + params["rrb"][l], kr, precision=HI)
        bd = _rel_shift_bnij(bd, S)
        prob = jax.nn.softmax((ac + bd) * scale, axis=-1)
        av = jnp.einsum("bnij,bjnd->bind", prob, v, precision=HI)
        ao = jnp.einsum("bind,hnd->bih", av, params["wo"][l], precision=HI)
        h1 = _ln(h + ao, params["ln1g"][l], params["ln1b"][l], 1e-12)
        u = jnp.einsum("bih,hf->bif", h1, params["w1"][l], precision=HI) + params["b1"][l]
        ff = jnp.einsum("bif,fh->bih", _gelu(u), params["w2"][l], precision=HI) + params["b2"][l]
        h = _ln(ff + h1, params["ln2g"][l], params["ln2b"][l], 1e-12)
    r1 = jnp.einsum("bih,hf->bif", h, params["wr1"], precision=HI) + params["br1"]
    r1 = jnp.maximum(_ln(r1, params["lnrg"], params["lnrb"], 1e-5), 0.0)
    recon = jnp.einsum("bif,fo->bio", r1, params["wr2"], precision=HI) + params["br2"]
    logits = jnp.einsum("bih,ho->bio", h, params["wc"], precision=HI) + params["bc"]
    return recon, logits


# ----------------------------- deterministic parameter init ----------------------
def init_params(key):
    keys = jax.random.split(key, 64)
    ki = iter(keys)

    def nrm(shape, scale=0.02):
        return scale * jax.random.normal(next(ki), shape, dtype=jnp.float32)

    L = N_LAYERS
    p = {
        "tok_emb": nrm((N_FEATURES, VOCAB, FEAT_DIM)),
        "pos_emb": nrm((1, MAX_LEN, D)),
        # XLNet relative-attention parameters (stacked over layers)
        "wq": nrm((L, D, N_HEADS, D_HEAD)),
        "wk": nrm((L, D, N_HEADS, D_HEAD)),
        "wv": nrm((L, D, N_HEADS, D_HEAD)),
        "wr": nrm((L, D, N_HEADS, D_HEAD)),
        "wo": nrm((L, D, N_HEADS, D_HEAD)),
        "rwb": nrm((L, N_HEADS, D_HEAD)),
        "rrb": nrm((L, N_HEADS, D_HEAD)),
        "ln1g": jnp.ones((L, D), jnp.float32),
        "ln1b": jnp.zeros((L, D), jnp.float32),
        # feed-forward
        "w1": nrm((L, D, D_INNER)),
        "b1": nrm((L, D_INNER)),
        "w2": nrm((L, D_INNER, D)),
        "b2": nrm((L, D)),
        "ln2g": jnp.ones((L, D), jnp.float32),
        "ln2b": jnp.zeros((L, D), jnp.float32),
        # reconstruction head
        "wr1": nrm((D, D_HALF)),
        "br1": nrm((1, D_HALF)),
        "lnrg": jnp.ones((1, D_HALF), jnp.float32),
        "lnrb": jnp.zeros((1, D_HALF), jnp.float32),
        "wr2": nrm((D_HALF, N_FEATURES)),
        "br2": nrm((1, N_FEATURES)),
        # classification head
        "wc": nrm((D, 2)),
        "bc": nrm((1, 2)),
        # attention_threshold exists in the module but is only returned when
        # output_attentions=True (not this path).
        "attention_threshold": jnp.float32(0.1),
    }
    return p


# ----------------------------- main ----------------------------------------------
if __name__ == "__main__":
    key = jax.random.PRNGKey(0)
    pkey, xkey = jax.random.split(key)
    params = init_params(pkey)
    x_tokens = jax.random.randint(xkey, (B, S, N_FEATURES), 0, VOCAB, dtype=jnp.int32)

    recon, logits = jax.block_until_ready(pallas_forward(x_tokens, params))
    assert recon.shape == (B, S, N_FEATURES) and recon.dtype == jnp.float32
    assert logits.shape == (B, S, 2) and logits.dtype == jnp.float32

    recon_ref, logits_ref = ref_forward(x_tokens, params)
    np.testing.assert_allclose(np.asarray(recon), np.asarray(recon_ref),
                               atol=2e-3, rtol=2e-3)
    np.testing.assert_allclose(np.asarray(logits), np.asarray(logits_ref),
                               atol=2e-3, rtol=2e-3)

    print("KERNEL_OK")
</pallas_src>

<mosaic_0001>
module attributes {stable_mosaic.version = 11 : i64} {
  func.func @xlnet_kernel(%arg0: memref<16x32xf32, #tpu.memory_space<vmem>>, %arg1: memref<16x128xf32, #tpu.memory_space<vmem>>, %arg2: memref<128x16xf32, #tpu.memory_space<vmem>>, %arg3: memref<128x32xf32, #tpu.memory_space<vmem>>, %arg4: memref<128x128xf32, #tpu.memory_space<vmem>>, %arg5: memref<2x32x128xf32, #tpu.memory_space<vmem>>, %arg6: memref<2x1x128xf32, #tpu.memory_space<vmem>>, %arg7: memref<2x1x32xf32, #tpu.memory_space<vmem>>, %arg8: memref<2x32x32xf32, #tpu.memory_space<vmem>>, %arg9: memref<2x32x32xf32, #tpu.memory_space<vmem>>, %arg10: memref<2x32x32xf32, #tpu.memory_space<vmem>>, %arg11: memref<2x32x32xf32, #tpu.memory_space<vmem>>, %arg12: memref<2x1x32xf32, #tpu.memory_space<vmem>>, %arg13: memref<2x1x32xf32, #tpu.memory_space<vmem>>, %arg14: memref<2x32x64xf32, #tpu.memory_space<vmem>>, %arg15: memref<2x1x64xf32, #tpu.memory_space<vmem>>, %arg16: memref<2x64x32xf32, #tpu.memory_space<vmem>>, %arg17: memref<2x1x32xf32, #tpu.memory_space<vmem>>, %arg18: memref<2x1x32xf32, #tpu.memory_space<vmem>>, %arg19: memref<2x1x32xf32, #tpu.memory_space<vmem>>, %arg20: memref<32x128xf32, #tpu.memory_space<vmem>>, %arg21: memref<1x128xf32, #tpu.memory_space<vmem>>, %arg22: memref<1x16xf32, #tpu.memory_space<vmem>>, %arg23: memref<1x16xf32, #tpu.memory_space<vmem>>, %arg24: memref<18x128xf32, #tpu.memory_space<vmem>>, %arg25: memref<1x128xf32, #tpu.memory_space<vmem>>, %arg26: memref<16x128xf32, #tpu.memory_space<vmem>>) attributes {dimension_semantics = [], scalar_prefetch = 0 : i64, scratch_operands = 0 : i64, tpu.core_type = #tpu.core_type<tc>} {
    %c0 = arith.constant 0 : index
    %c0_0 = arith.constant 0 : index
    %0 = vector.load %arg0[%c0, %c0_0] : memref<16x32xf32, #tpu.memory_space<vmem>>, vector<16x32xf32>
    %c0_1 = arith.constant 0 : index
    %c0_2 = arith.constant 0 : index
    %1 = vector.load %arg1[%c0_1, %c0_2] : memref<16x128xf32, #tpu.memory_space<vmem>>, vector<16x128xf32>
    %c0_3 = arith.constant 0 : index
    %c0_4 = arith.constant 0 : index
    %2 = vector.load %arg2[%c0_3, %c0_4] : memref<128x16xf32, #tpu.memory_space<vmem>>, vector<128x16xf32>
    %c0_5 = arith.constant 0 : index
    %c0_6 = arith.constant 0 : index
    %3 = vector.load %arg3[%c0_5, %c0_6] : memref<128x32xf32, #tpu.memory_space<vmem>>, vector<128x32xf32>
    %c0_7 = arith.constant 0 : index
    %c0_8 = arith.constant 0 : index
    %4 = vector.load %arg4[%c0_7, %c0_8] : memref<128x128xf32, #tpu.memory_space<vmem>>, vector<128x128xf32>
    %c0_9 = arith.constant 0 : index
    %c0_10 = arith.constant 0 : index
    %c0_11 = arith.constant 0 : index
    %5 = vector.load %arg8[%c0_9, %c0_10, %c0_11] : memref<2x32x32xf32, #tpu.memory_space<vmem>>, vector<1x32x32xf32>
    %6 = vector.shape_cast %5 : vector<1x32x32xf32> to vector<32x32xf32>
    %cst = arith.constant dense<0.000000e+00> : vector<16x32xf32>
    %7 = tpu.matmul %0, %6, %cst {dimension_numbers = #tpu.dot_dimension_numbers<[1], [0], [0], [1], [0, 0, 1, 1], [], []>} : vector<16x32xf32>, vector<32x32xf32>, vector<16x32xf32> -> vector<16x32xf32>
    %c0_12 = arith.constant 0 : index
    %c0_13 = arith.constant 0 : index
    %c0_14 = arith.constant 0 : index
    %8 = vector.load %arg9[%c0_12, %c0_13, %c0_14] : memref<2x32x32xf32, #tpu.memory_space<vmem>>, vector<1x32x32xf32>
    %9 = vector.shape_cast %8 : vector<1x32x32xf32> to vector<32x32xf32>
    %cst_15 = arith.constant dense<0.000000e+00> : vector<16x32xf32>
    %10 = tpu.matmul %0, %9, %cst_15 {dimension_numbers = #tpu.dot_dimension_numbers<[1], [0], [0], [1], [0, 0, 1, 1], [], []>} : vector<16x32xf32>, vector<32x32xf32>, vector<16x32xf32> -> vector<16x32xf32>
    %c0_16 = arith.constant 0 : index
    %c0_17 = arith.constant 0 : index
    %c0_18 = arith.constant 0 : index
    %11 = vector.load %arg10[%c0_16, %c0_17, %c0_18] : memref<2x32x32xf32, #tpu.memory_space<vmem>>, vector<1x32x32xf32>
    %12 = vector.shape_cast %11 : vector<1x32x32xf32> to vector<32x32xf32>
    %cst_19 = arith.constant dense<0.000000e+00> : vector<16x32xf32>
    %13 = tpu.matmul %0, %12, %cst_19 {dimension_numbers = #tpu.dot_dimension_numbers<[1], [0], [0], [1], [0, 0, 1, 1], [], []>} : vector<16x32xf32>, vector<32x32xf32>, vector<16x32xf32> -> vector<16x32xf32>
    %cst_20 = arith.constant dense<0.000000e+00> : vector<128x32xf32>
    %14 = tpu.matmul %2, %10, %cst_20 {dimension_numbers = #tpu.dot_dimension_numbers<[1], [0], [0], [1], [0, 0, 1, 1], [], []>} : vector<128x16xf32>, vector<16x32xf32>, vector<128x32xf32> -> vector<128x32xf32>
    %15 = arith.mulf %14, %3 : vector<128x32xf32>
    %cst_21 = arith.constant dense<0.000000e+00> : vector<128x32xf32>
    %16 = tpu.matmul %2, %13, %cst_21 {dimension_numbers = #tpu.dot_dimension_numbers<[1], [0], [0], [1], [0, 0, 1, 1], [], []>} : vector<128x16xf32>, vector<16x32xf32>, vector<128x32xf32> -> vector<128x32xf32>
    %17 = arith.mulf %16, %3 : vector<128x32xf32>
    %c0_22 = arith.constant 0 : index
    %c0_23 = arith.constant 0 : index
    %c0_24 = arith.constant 0 : index
    %18 = vector.load %arg7[%c0_22, %c0_23, %c0_24] : memref<2x1x32xf32, #tpu.memory_space<vmem>>, vector<1x1x32xf32>
    %19 = vector.shape_cast %18 : vector<1x1x32xf32> to vector<1x32xf32>
    %20 = vector.broadcast %19 : vector<1x32xf32> to vector<16x32xf32>
    %21 = arith.addf %7, %20 : vector<16x32xf32>
    %cst_25 = arith.constant dense<0.000000e+00> : vector<16x128xf32>
    %22 = tpu.matmul %21, %15, %cst_25 {dimension_numbers = #tpu.dot_dimension_numbers<[1], [1], [0], [0], [0, 0, 1, 0], [], []>} : vector<16x32xf32>, vector<128x32xf32>, vector<16x128xf32> -> vector<16x128xf32>
    %c0_26 = arith.constant 0 : index
    %c0_27 = arith.constant 0 : index
    %c0_28 = arith.constant 0 : index
    %23 = vector.load %arg5[%c0_26, %c0_27, %c0_28] : memref<2x32x128xf32, #tpu.memory_space<vmem>>, vector<1x32x128xf32>
    %24 = vector.shape_cast %23 : vector<1x32x128xf32> to vector<32x128xf32>
    %cst_29 = arith.constant dense<0.000000e+00> : vector<16x128xf32>
    %25 = tpu.matmul %7, %24, %cst_29 {dimension_numbers = #tpu.dot_dimension_numbers<[1], [0], [0], [1], [0, 0, 1, 1], [], []>} : vector<16x32xf32>, vector<32x128xf32>, vector<16x128xf32> -> vector<16x128xf32>
    %c0_30 = arith.constant 0 : index
    %c0_31 = arith.constant 0 : index
    %c0_32 = arith.constant 0 : index
    %26 = vector.load %arg6[%c0_30, %c0_31, %c0_32] : memref<2x1x128xf32, #tpu.memory_space<vmem>>, vector<1x1x128xf32>
    %27 = vector.shape_cast %26 : vector<1x1x128xf32> to vector<1x128xf32>
    %28 = vector.broadcast %27 : vector<1x128xf32> to vector<16x128xf32>
    %29 = arith.addf %25, %28 : vector<16x128xf32>
    %30 = vector.extract_strided_slice %29 {offsets = [0, 0], sizes = [8, 128], strides = [1, 1]} : vector<16x128xf32> to vector<8x128xf32>
    %c120_i32 = arith.constant 120 : i32
    %31 = tpu.dynamic_rotate %30 by %c120_i32 dim 1 {stride = 1 : si32, stride_dimension = 0 : si32} : vector<8x128xf32>, i32 -> vector<8x128xf32>
    %32 = vector.extract_strided_slice %29 {offsets = [8, 0], sizes = [8, 128], strides = [1, 1]} : vector<16x128xf32> to vector<8x128xf32>
    %c120_i32_33 = arith.constant 120 : i32
    %33 = tpu.dynamic_rotate %32 by %c120_i32_33 dim 1 {stride = 1 : si32, stride_dimension = 0 : si32} : vector<8x128xf32>, i32 -> vector<8x128xf32>
    %34 = tpu.concatenate %31, %33 in 0 : vector<8x128xf32>, vector<8x128xf32> -> vector<16x128xf32>
    %35 = arith.addf %22, %34 : vector<16x128xf32>
    %36 = arith.addf %35, %1 : vector<16x128xf32>
    %cst_34 = arith.constant dense<0xFF800000> : vector<16xf32>
    %37 = vector.multi_reduction <maximumf>, %36, %cst_34 [1] : vector<16x128xf32> to vector<16xf32>
    %38 = vector.shape_cast %37 : vector<16xf32> to vector<16x1xf32>
    %39 = vector.broadcast %38 : vector<16x1xf32> to vector<16x128xf32>
    %40 = arith.subf %36, %39 : vector<16x128xf32>
    %41 = math.exp %40 : vector<16x128xf32>
    %cst_35 = arith.constant dense<0.000000e+00> : vector<16x128xf32>
    %42 = tpu.matmul %41, %4, %cst_35 {dimension_numbers = #tpu.dot_dimension_numbers<[1], [0], [0], [1], [0, 0, 1, 1], [], []>} : vector<16x128xf32>, vector<128x128xf32>, vector<16x128xf32> -> vector<16x128xf32>
    %cst_36 = arith.constant 1.000000e-30 : f32
    %43 = vector.broadcast %cst_36 : f32 to vector<16x128xf32>
    %44 = arith.addf %42, %43 : vector<16x128xf32>
    %45 = tpu.reciprocal %44 {approx = true} : vector<16x128xf32> -> vector<16x128xf32>
    %46 = arith.mulf %41, %45 : vector<16x128xf32>
    %cst_37 = arith.constant dense<0.000000e+00> : vector<16x32xf32>
    %47 = tpu.matmul %46, %17, %cst_37 {dimension_numbers = #tpu.dot_dimension_numbers<[1], [0], [0], [1], [0, 0, 1, 1], [], []>} : vector<16x128xf32>, vector<128x32xf32>, vector<16x32xf32> -> vector<16x32xf32>
    %c0_38 = arith.constant 0 : index
    %c0_39 = arith.constant 0 : index
    %c0_40 = arith.constant 0 : index
    %48 = vector.load %arg11[%c0_38, %c0_39, %c0_40] : memref<2x32x32xf32, #tpu.memory_space<vmem>>, vector<1x32x32xf32>
    %49 = vector.shape_cast %48 : vector<1x32x32xf32> to vector<32x32xf32>
    %cst_41 = arith.constant dense<0.000000e+00> : vector<16x32xf32>
    %50 = tpu.matmul %47, %49, %cst_41 {dimension_numbers = #tpu.dot_dimension_numbers<[1], [0], [0], [1], [0, 0, 1, 1], [], []>} : vector<16x32xf32>, vector<32x32xf32>, vector<16x32xf32> -> vector<16x32xf32>
    %51 = arith.addf %0, %50 : vector<16x32xf32>
    %c0_42 = arith.constant 0 : index
    %c0_43 = arith.constant 0 : index
    %c0_44 = arith.constant 0 : index
    %52 = vector.load %arg12[%c0_42, %c0_43, %c0_44] : memref<2x1x32xf32, #tpu.memory_space<vmem>>, vector<1x1x32xf32>
    %53 = vector.shape_cast %52 : vector<1x1x32xf32> to vector<1x32xf32>
    %c0_45 = arith.constant 0 : index
    %c0_46 = arith.constant 0 : index
    %c0_47 = arith.constant 0 : index
    %54 = vector.load %arg13[%c0_45, %c0_46, %c0_47] : memref<2x1x32xf32, #tpu.memory_space<vmem>>, vector<1x1x32xf32>
    %55 = vector.shape_cast %54 : vector<1x1x32xf32> to vector<1x32xf32>
    %cst_48 = arith.constant dense<0.000000e+00> : vector<16xf32>
    %56 = vector.multi_reduction <add>, %51, %cst_48 [1] : vector<16x32xf32> to vector<16xf32>
    %57 = vector.shape_cast %56 : vector<16xf32> to vector<16x1xf32>
    %cst_49 = arith.constant 3.200000e+01 : f32
    %58 = vector.broadcast %cst_49 : f32 to vector<16x1xf32>
    %59 = arith.divf %57, %58 : vector<16x1xf32>
    %60 = vector.broadcast %59 : vector<16x1xf32> to vector<16x32xf32>
    %61 = arith.subf %51, %60 : vector<16x32xf32>
    %62 = arith.mulf %61, %61 : vector<16x32xf32>
    %cst_50 = arith.constant dense<0.000000e+00> : vector<16xf32>
    %63 = vector.multi_reduction <add>, %62, %cst_50 [1] : vector<16x32xf32> to vector<16xf32>
    %64 = vector.shape_cast %63 : vector<16xf32> to vector<16x1xf32>
    %cst_51 = arith.constant 3.200000e+01 : f32
    %65 = vector.broadcast %cst_51 : f32 to vector<16x1xf32>
    %66 = arith.divf %64, %65 : vector<16x1xf32>
    %67 = vector.broadcast %59 : vector<16x1xf32> to vector<16x32xf32>
    %68 = arith.subf %51, %67 : vector<16x32xf32>
    %cst_52 = arith.constant 9.99999996E-13 : f32
    %69 = vector.broadcast %cst_52 : f32 to vector<16x1xf32>
    %70 = arith.addf %66, %69 : vector<16x1xf32>
    %71 = math.rsqrt %70 : vector<16x1xf32>
    %72 = vector.broadcast %71 : vector<16x1xf32> to vector<16x32xf32>
    %73 = arith.mulf %68, %72 : vector<16x32xf32>
    %74 = vector.broadcast %53 : vector<1x32xf32> to vector<16x32xf32>
    %75 = arith.mulf %73, %74 : vector<16x32xf32>
    %76 = vector.broadcast %55 : vector<1x32xf32> to vector<16x32xf32>
    %77 = arith.addf %75, %76 : vector<16x32xf32>
    %c0_53 = arith.constant 0 : index
    %c0_54 = arith.constant 0 : index
    %c0_55 = arith.constant 0 : index
    %78 = vector.load %arg14[%c0_53, %c0_54, %c0_55] : memref<2x32x64xf32, #tpu.memory_space<vmem>>, vector<1x32x64xf32>
    %79 = vector.shape_cast %78 : vector<1x32x64xf32> to vector<32x64xf32>
    %cst_56 = arith.constant dense<0.000000e+00> : vector<16x64xf32>
    %80 = tpu.matmul %77, %79, %cst_56 {dimension_numbers = #tpu.dot_dimension_numbers<[1], [0], [0], [1], [0, 0, 1, 1], [], []>} : vector<16x32xf32>, vector<32x64xf32>, vector<16x64xf32> -> vector<16x64xf32>
    %c0_57 = arith.constant 0 : index
    %c0_58 = arith.constant 0 : index
    %c0_59 = arith.constant 0 : index
    %81 = vector.load %arg15[%c0_57, %c0_58, %c0_59] : memref<2x1x64xf32, #tpu.memory_space<vmem>>, vector<1x1x64xf32>
    %82 = vector.shape_cast %81 : vector<1x1x64xf32> to vector<1x64xf32>
    %83 = vector.broadcast %82 : vector<1x64xf32> to vector<16x64xf32>
    %84 = arith.addf %80, %83 : vector<16x64xf32>
    %cst_60 = arith.constant 5.000000e-01 : f32
    %85 = vector.broadcast %cst_60 : f32 to vector<16x64xf32>
    %86 = arith.mulf %85, %84 : vector<16x64xf32>
    %cst_61 = arith.constant 0.707106769 : f32
    %87 = vector.broadcast %cst_61 : f32 to vector<16x64xf32>
    %88 = arith.mulf %84, %87 : vector<16x64xf32>
    %89 = math.erf %88 : vector<16x64xf32>
    %cst_62 = arith.constant 1.000000e+00 : f32
    %90 = vector.broadcast %cst_62 : f32 to vector<16x64xf32>
    %91 = arith.addf %90, %89 : vector<16x64xf32>
    %92 = arith.mulf %86, %91 : vector<16x64xf32>
    %c0_63 = arith.constant 0 : index
    %c0_64 = arith.constant 0 : index
    %c0_65 = arith.constant 0 : index
    %93 = vector.load %arg16[%c0_63, %c0_64, %c0_65] : memref<2x64x32xf32, #tpu.memory_space<vmem>>, vector<1x64x32xf32>
    %94 = vector.shape_cast %93 : vector<1x64x32xf32> to vector<64x32xf32>
    %cst_66 = arith.constant dense<0.000000e+00> : vector<16x32xf32>
    %95 = tpu.matmul %92, %94, %cst_66 {dimension_numbers = #tpu.dot_dimension_numbers<[1], [0], [0], [1], [0, 0, 1, 1], [], []>} : vector<16x64xf32>, vector<64x32xf32>, vector<16x32xf32> -> vector<16x32xf32>
    %c0_67 = arith.constant 0 : index
    %c0_68 = arith.constant 0 : index
    %c0_69 = arith.constant 0 : index
    %96 = vector.load %arg17[%c0_67, %c0_68, %c0_69] : memref<2x1x32xf32, #tpu.memory_space<vmem>>, vector<1x1x32xf32>
    %97 = vector.shape_cast %96 : vector<1x1x32xf32> to vector<1x32xf32>
    %98 = vector.broadcast %97 : vector<1x32xf32> to vector<16x32xf32>
    %99 = arith.addf %95, %98 : vector<16x32xf32>
    %100 = arith.addf %99, %77 : vector<16x32xf32>
    %c0_70 = arith.constant 0 : index
    %c0_71 = arith.constant 0 : index
    %c0_72 = arith.constant 0 : index
    %101 = vector.load %arg18[%c0_70, %c0_71, %c0_72] : memref<2x1x32xf32, #tpu.memory_space<vmem>>, vector<1x1x32xf32>
    %102 = vector.shape_cast %101 : vector<1x1x32xf32> to vector<1x32xf32>
    %c0_73 = arith.constant 0 : index
    %c0_74 = arith.constant 0 : index
    %c0_75 = arith.constant 0 : index
    %103 = vector.load %arg19[%c0_73, %c0_74, %c0_75] : memref<2x1x32xf32, #tpu.memory_space<vmem>>, vector<1x1x32xf32>
    %104 = vector.shape_cast %103 : vector<1x1x32xf32> to vector<1x32xf32>
    %cst_76 = arith.constant dense<0.000000e+00> : vector<16xf32>
    %105 = vector.multi_reduction <add>, %100, %cst_76 [1] : vector<16x32xf32> to vector<16xf32>
    %106 = vector.shape_cast %105 : vector<16xf32> to vector<16x1xf32>
    %cst_77 = arith.constant 3.200000e+01 : f32
    %107 = vector.broadcast %cst_77 : f32 to vector<16x1xf32>
    %108 = arith.divf %106, %107 : vector<16x1xf32>
    %109 = vector.broadcast %108 : vector<16x1xf32> to vector<16x32xf32>
    %110 = arith.subf %100, %109 : vector<16x32xf32>
    %111 = arith.mulf %110, %110 : vector<16x32xf32>
    %cst_78 = arith.constant dense<0.000000e+00> : vector<16xf32>
    %112 = vector.multi_reduction <add>, %111, %cst_78 [1] : vector<16x32xf32> to vector<16xf32>
    %113 = vector.shape_cast %112 : vector<16xf32> to vector<16x1xf32>
    %cst_79 = arith.constant 3.200000e+01 : f32
    %114 = vector.broadcast %cst_79 : f32 to vector<16x1xf32>
    %115 = arith.divf %113, %114 : vector<16x1xf32>
    %116 = vector.broadcast %108 : vector<16x1xf32> to vector<16x32xf32>
    %117 = arith.subf %100, %116 : vector<16x32xf32>
    %cst_80 = arith.constant 9.99999996E-13 : f32
    %118 = vector.broadcast %cst_80 : f32 to vector<16x1xf32>
    %119 = arith.addf %115, %118 : vector<16x1xf32>
    %120 = math.rsqrt %119 : vector<16x1xf32>
    %121 = vector.broadcast %120 : vector<16x1xf32> to vector<16x32xf32>
    %122 = arith.mulf %117, %121 : vector<16x32xf32>
    %123 = vector.broadcast %102 : vector<1x32xf32> to vector<16x32xf32>
    %124 = arith.mulf %122, %123 : vector<16x32xf32>
    %125 = vector.broadcast %104 : vector<1x32xf32> to vector<16x32xf32>
    %126 = arith.addf %124, %125 : vector<16x32xf32>
    %c1 = arith.constant 1 : index
    %c0_81 = arith.constant 0 : index
    %c0_82 = arith.constant 0 : index
    %127 = vector.load %arg8[%c1, %c0_81, %c0_82] : memref<2x32x32xf32, #tpu.memory_space<vmem>>, vector<1x32x32xf32>
    %128 = vector.shape_cast %127 : vector<1x32x32xf32> to vector<32x32xf32>
    %cst_83 = arith.constant dense<0.000000e+00> : vector<16x32xf32>
    %129 = tpu.matmul %126, %128, %cst_83 {dimension_numbers = #tpu.dot_dimension_numbers<[1], [0], [0], [1], [0, 0, 1, 1], [], []>} : vector<16x32xf32>, vector<32x32xf32>, vector<16x32xf32> -> vector<16x32xf32>
    %c1_84 = arith.constant 1 : index
    %c0_85 = arith.constant 0 : index
    %c0_86 = arith.constant 0 : index
    %130 = vector.load %arg9[%c1_84, %c0_85, %c0_86] : memref<2x32x32xf32, #tpu.memory_space<vmem>>, vector<1x32x32xf32>
    %131 = vector.shape_cast %130 : vector<1x32x32xf32> to vector<32x32xf32>
    %cst_87 = arith.constant dense<0.000000e+00> : vector<16x32xf32>
    %132 = tpu.matmul %126, %131, %cst_87 {dimension_numbers = #tpu.dot_dimension_numbers<[1], [0], [0], [1], [0, 0, 1, 1], [], []>} : vector<16x32xf32>, vector<32x32xf32>, vector<16x32xf32> -> vector<16x32xf32>
    %c1_88 = arith.constant 1 : index
    %c0_89 = arith.constant 0 : index
    %c0_90 = arith.constant 0 : index
    %133 = vector.load %arg10[%c1_88, %c0_89, %c0_90] : memref<2x32x32xf32, #tpu.memory_space<vmem>>, vector<1x32x32xf32>
    %134 = vector.shape_cast %133 : vector<1x32x32xf32> to vector<32x32xf32>
    %cst_91 = arith.constant dense<0.000000e+00> : vector<16x32xf32>
    %135 = tpu.matmul %126, %134, %cst_91 {dimension_numbers = #tpu.dot_dimension_numbers<[1], [0], [0], [1], [0, 0, 1, 1], [], []>} : vector<16x32xf32>, vector<32x32xf32>, vector<16x32xf32> -> vector<16x32xf32>
    %cst_92 = arith.constant dense<0.000000e+00> : vector<128x32xf32>
    %136 = tpu.matmul %2, %132, %cst_92 {dimension_numbers = #tpu.dot_dimension_numbers<[1], [0], [0], [1], [0, 0, 1, 1], [], []>} : vector<128x16xf32>, vector<16x32xf32>, vector<128x32xf32> -> vector<128x32xf32>
    %137 = arith.mulf %136, %3 : vector<128x32xf32>
    %cst_93 = arith.constant dense<0.000000e+00> : vector<128x32xf32>
    %138 = tpu.matmul %2, %135, %cst_93 {dimension_numbers = #tpu.dot_dimension_numbers<[1], [0], [0], [1], [0, 0, 1, 1], [], []>} : vector<128x16xf32>, vector<16x32xf32>, vector<128x32xf32> -> vector<128x32xf32>
    %139 = arith.mulf %138, %3 : vector<128x32xf32>
    %c1_94 = arith.constant 1 : index
    %c0_95 = arith.constant 0 : index
    %c0_96 = arith.constant 0 : index
    %140 = vector.load %arg7[%c1_94, %c0_95, %c0_96] : memref<2x1x32xf32, #tpu.memory_space<vmem>>, vector<1x1x32xf32>
    %141 = vector.shape_cast %140 : vector<1x1x32xf32> to vector<1x32xf32>
    %142 = vector.broadcast %141 : vector<1x32xf32> to vector<16x32xf32>
    %143 = arith.addf %129, %142 : vector<16x32xf32>
    %cst_97 = arith.constant dense<0.000000e+00> : vector<16x128xf32>
    %144 = tpu.matmul %143, %137, %cst_97 {dimension_numbers = #tpu.dot_dimension_numbers<[1], [1], [0], [0], [0, 0, 1, 0], [], []>} : vector<16x32xf32>, vector<128x32xf32>, vector<16x128xf32> -> vector<16x128xf32>
    %c1_98 = arith.constant 1 : index
    %c0_99 = arith.constant 0 : index
    %c0_100 = arith.constant 0 : index
    %145 = vector.load %arg5[%c1_98, %c0_99, %c0_100] : memref<2x32x128xf32, #tpu.memory_space<vmem>>, vector<1x32x128xf32>
    %146 = vector.shape_cast %145 : vector<1x32x128xf32> to vector<32x128xf32>
    %cst_101 = arith.constant dense<0.000000e+00> : vector<16x128xf32>
    %147 = tpu.matmul %129, %146, %cst_101 {dimension_numbers = #tpu.dot_dimension_numbers<[1], [0], [0], [1], [0, 0, 1, 1], [], []>} : vector<16x32xf32>, vector<32x128xf32>, vector<16x128xf32> -> vector<16x128xf32>
    %c1_102 = arith.constant 1 : index
    %c0_103 = arith.constant 0 : index
    %c0_104 = arith.constant 0 : index
    %148 = vector.load %arg6[%c1_102, %c0_103, %c0_104] : memref<2x1x128xf32, #tpu.memory_space<vmem>>, vector<1x1x128xf32>
    %149 = vector.shape_cast %148 : vector<1x1x128xf32> to vector<1x128xf32>
    %150 = vector.broadcast %149 : vector<1x128xf32> to vector<16x128xf32>
    %151 = arith.addf %147, %150 : vector<16x128xf32>
    %152 = vector.extract_strided_slice %151 {offsets = [0, 0], sizes = [8, 128], strides = [1, 1]} : vector<16x128xf32> to vector<8x128xf32>
    %c120_i32_105 = arith.constant 120 : i32
    %153 = tpu.dynamic_rotate %152 by %c120_i32_105 dim 1 {stride = 1 : si32, stride_dimension = 0 : si32} : vector<8x128xf32>, i32 -> vector<8x128xf32>
    %154 = vector.extract_strided_slice %151 {offsets = [8, 0], sizes = [8, 128], strides = [1, 1]} : vector<16x128xf32> to vector<8x128xf32>
    %c120_i32_106 = arith.constant 120 : i32
    %155 = tpu.dynamic_rotate %154 by %c120_i32_106 dim 1 {stride = 1 : si32, stride_dimension = 0 : si32} : vector<8x128xf32>, i32 -> vector<8x128xf32>
    %156 = tpu.concatenate %153, %155 in 0 : vector<8x128xf32>, vector<8x128xf32> -> vector<16x128xf32>
    %157 = arith.addf %144, %156 : vector<16x128xf32>
    %158 = arith.addf %157, %1 : vector<16x128xf32>
    %cst_107 = arith.constant dense<0xFF800000> : vector<16xf32>
    %159 = vector.multi_reduction <maximumf>, %158, %cst_107 [1] : vector<16x128xf32> to vector<16xf32>
    %160 = vector.shape_cast %159 : vector<16xf32> to vector<16x1xf32>
    %161 = vector.broadcast %160 : vector<16x1xf32> to vector<16x128xf32>
    %162 = arith.subf %158, %161 : vector<16x128xf32>
    %163 = math.exp %162 : vector<16x128xf32>
    %cst_108 = arith.constant dense<0.000000e+00> : vector<16x128xf32>
    %164 = tpu.matmul %163, %4, %cst_108 {dimension_numbers = #tpu.dot_dimension_numbers<[1], [0], [0], [1], [0, 0, 1, 1], [], []>} : vector<16x128xf32>, vector<128x128xf32>, vector<16x128xf32> -> vector<16x128xf32>
    %cst_109 = arith.constant 1.000000e-30 : f32
    %165 = vector.broadcast %cst_109 : f32 to vector<16x128xf32>
    %166 = arith.addf %164, %165 : vector<16x128xf32>
    %167 = tpu.reciprocal %166 {approx = true} : vector<16x128xf32> -> vector<16x128xf32>
    %168 = arith.mulf %163, %167 : vector<16x128xf32>
    %cst_110 = arith.constant dense<0.000000e+00> : vector<16x32xf32>
    %169 = tpu.matmul %168, %139, %cst_110 {dimension_numbers = #tpu.dot_dimension_numbers<[1], [0], [0], [1], [0, 0, 1, 1], [], []>} : vector<16x128xf32>, vector<128x32xf32>, vector<16x32xf32> -> vector<16x32xf32>
    %c1_111 = arith.constant 1 : index
    %c0_112 = arith.constant 0 : index
    %c0_113 = arith.constant 0 : index
    %170 = vector.load %arg11[%c1_111, %c0_112, %c0_113] : memref<2x32x32xf32, #tpu.memory_space<vmem>>, vector<1x32x32xf32>
    %171 = vector.shape_cast %170 : vector<1x32x32xf32> to vector<32x32xf32>
    %cst_114 = arith.constant dense<0.000000e+00> : vector<16x32xf32>
    %172 = tpu.matmul %169, %171, %cst_114 {dimension_numbers = #tpu.dot_dimension_numbers<[1], [0], [0], [1], [0, 0, 1, 1], [], []>} : vector<16x32xf32>, vector<32x32xf32>, vector<16x32xf32> -> vector<16x32xf32>
    %173 = arith.addf %126, %172 : vector<16x32xf32>
    %c1_115 = arith.constant 1 : index
    %c0_116 = arith.constant 0 : index
    %c0_117 = arith.constant 0 : index
    %174 = vector.load %arg12[%c1_115, %c0_116, %c0_117] : memref<2x1x32xf32, #tpu.memory_space<vmem>>, vector<1x1x32xf32>
    %175 = vector.shape_cast %174 : vector<1x1x32xf32> to vector<1x32xf32>
    %c1_118 = arith.constant 1 : index
    %c0_119 = arith.constant 0 : index
    %c0_120 = arith.constant 0 : index
    %176 = vector.load %arg13[%c1_118, %c0_119, %c0_120] : memref<2x1x32xf32, #tpu.memory_space<vmem>>, vector<1x1x32xf32>
    %177 = vector.shape_cast %176 : vector<1x1x32xf32> to vector<1x32xf32>
    %cst_121 = arith.constant dense<0.000000e+00> : vector<16xf32>
    %178 = vector.multi_reduction <add>, %173, %cst_121 [1] : vector<16x32xf32> to vector<16xf32>
    %179 = vector.shape_cast %178 : vector<16xf32> to vector<16x1xf32>
    %cst_122 = arith.constant 3.200000e+01 : f32
    %180 = vector.broadcast %cst_122 : f32 to vector<16x1xf32>
    %181 = arith.divf %179, %180 : vector<16x1xf32>
    %182 = vector.broadcast %181 : vector<16x1xf32> to vector<16x32xf32>
    %183 = arith.subf %173, %182 : vector<16x32xf32>
    %184 = arith.mulf %183, %183 : vector<16x32xf32>
    %cst_123 = arith.constant dense<0.000000e+00> : vector<16xf32>
    %185 = vector.multi_reduction <add>, %184, %cst_123 [1] : vector<16x32xf32> to vector<16xf32>
    %186 = vector.shape_cast %185 : vector<16xf32> to vector<16x1xf32>
    %cst_124 = arith.constant 3.200000e+01 : f32
    %187 = vector.broadcast %cst_124 : f32 to vector<16x1xf32>
    %188 = arith.divf %186, %187 : vector<16x1xf32>
    %189 = vector.broadcast %181 : vector<16x1xf32> to vector<16x32xf32>
    %190 = arith.subf %173, %189 : vector<16x32xf32>
    %cst_125 = arith.constant 9.99999996E-13 : f32
    %191 = vector.broadcast %cst_125 : f32 to vector<16x1xf32>
    %192 = arith.addf %188, %191 : vector<16x1xf32>
    %193 = math.rsqrt %192 : vector<16x1xf32>
    %194 = vector.broadcast %193 : vector<16x1xf32> to vector<16x32xf32>
    %195 = arith.mulf %190, %194 : vector<16x32xf32>
    %196 = vector.broadcast %175 : vector<1x32xf32> to vector<16x32xf32>
    %197 = arith.mulf %195, %196 : vector<16x32xf32>
    %198 = vector.broadcast %177 : vector<1x32xf32> to vector<16x32xf32>
    %199 = arith.addf %197, %198 : vector<16x32xf32>
    %c1_126 = arith.constant 1 : index
    %c0_127 = arith.constant 0 : index
    %c0_128 = arith.constant 0 : index
    %200 = vector.load %arg14[%c1_126, %c0_127, %c0_128] : memref<2x32x64xf32, #tpu.memory_space<vmem>>, vector<1x32x64xf32>
    %201 = vector.shape_cast %200 : vector<1x32x64xf32> to vector<32x64xf32>
    %cst_129 = arith.constant dense<0.000000e+00> : vector<16x64xf32>
    %202 = tpu.matmul %199, %201, %cst_129 {dimension_numbers = #tpu.dot_dimension_numbers<[1], [0], [0], [1], [0, 0, 1, 1], [], []>} : vector<16x32xf32>, vector<32x64xf32>, vector<16x64xf32> -> vector<16x64xf32>
    %c1_130 = arith.constant 1 : index
    %c0_131 = arith.constant 0 : index
    %c0_132 = arith.constant 0 : index
    %203 = vector.load %arg15[%c1_130, %c0_131, %c0_132] : memref<2x1x64xf32, #tpu.memory_space<vmem>>, vector<1x1x64xf32>
    %204 = vector.shape_cast %203 : vector<1x1x64xf32> to vector<1x64xf32>
    %205 = vector.broadcast %204 : vector<1x64xf32> to vector<16x64xf32>
    %206 = arith.addf %202, %205 : vector<16x64xf32>
    %cst_133 = arith.constant 5.000000e-01 : f32
    %207 = vector.broadcast %cst_133 : f32 to vector<16x64xf32>
    %208 = arith.mulf %207, %206 : vector<16x64xf32>
    %cst_134 = arith.constant 0.707106769 : f32
    %209 = vector.broadcast %cst_134 : f32 to vector<16x64xf32>
    %210 = arith.mulf %206, %209 : vector<16x64xf32>
    %211 = math.erf %210 : vector<16x64xf32>
    %cst_135 = arith.constant 1.000000e+00 : f32
    %212 = vector.broadcast %cst_135 : f32 to vector<16x64xf32>
    %213 = arith.addf %212, %211 : vector<16x64xf32>
    %214 = arith.mulf %208, %213 : vector<16x64xf32>
    %c1_136 = arith.constant 1 : index
    %c0_137 = arith.constant 0 : index
    %c0_138 = arith.constant 0 : index
    %215 = vector.load %arg16[%c1_136, %c0_137, %c0_138] : memref<2x64x32xf32, #tpu.memory_space<vmem>>, vector<1x64x32xf32>
    %216 = vector.shape_cast %215 : vector<1x64x32xf32> to vector<64x32xf32>
    %cst_139 = arith.constant dense<0.000000e+00> : vector<16x32xf32>
    %217 = tpu.matmul %214, %216, %cst_139 {dimension_numbers = #tpu.dot_dimension_numbers<[1], [0], [0], [1], [0, 0, 1, 1], [], []>} : vector<16x64xf32>, vector<64x32xf32>, vector<16x32xf32> -> vector<16x32xf32>
    %c1_140 = arith.constant 1 : index
    %c0_141 = arith.constant 0 : index
    %c0_142 = arith.constant 0 : index
    %218 = vector.load %arg17[%c1_140, %c0_141, %c0_142] : memref<2x1x32xf32, #tpu.memory_space<vmem>>, vector<1x1x32xf32>
    %219 = vector.shape_cast %218 : vector<1x1x32xf32> to vector<1x32xf32>
    %220 = vector.broadcast %219 : vector<1x32xf32> to vector<16x32xf32>
    %221 = arith.addf %217, %220 : vector<16x32xf32>
    %222 = arith.addf %221, %199 : vector<16x32xf32>
    %c1_143 = arith.constant 1 : index
    %c0_144 = arith.constant 0 : index
    %c0_145 = arith.constant 0 : index
    %223 = vector.load %arg18[%c1_143, %c0_144, %c0_145] : memref<2x1x32xf32, #tpu.memory_space<vmem>>, vector<1x1x32xf32>
    %224 = vector.shape_cast %223 : vector<1x1x32xf32> to vector<1x32xf32>
    %c1_146 = arith.constant 1 : index
    %c0_147 = arith.constant 0 : index
    %c0_148 = arith.constant 0 : index
    %225 = vector.load %arg19[%c1_146, %c0_147, %c0_148] : memref<2x1x32xf32, #tpu.memory_space<vmem>>, vector<1x1x32xf32>
    %226 = vector.shape_cast %225 : vector<1x1x32xf32> to vector<1x32xf32>
    %cst_149 = arith.constant dense<0.000000e+00> : vector<16xf32>
    %227 = vector.multi_reduction <add>, %222, %cst_149 [1] : vector<16x32xf32> to vector<16xf32>
    %228 = vector.shape_cast %227 : vector<16xf32> to vector<16x1xf32>
    %cst_150 = arith.constant 3.200000e+01 : f32
    %229 = vector.broadcast %cst_150 : f32 to vector<16x1xf32>
    %230 = arith.divf %228, %229 : vector<16x1xf32>
    %231 = vector.broadcast %230 : vector<16x1xf32> to vector<16x32xf32>
    %232 = arith.subf %222, %231 : vector<16x32xf32>
    %233 = arith.mulf %232, %232 : vector<16x32xf32>
    %cst_151 = arith.constant dense<0.000000e+00> : vector<16xf32>
    %234 = vector.multi_reduction <add>, %233, %cst_151 [1] : vector<16x32xf32> to vector<16xf32>
    %235 = vector.shape_cast %234 : vector<16xf32> to vector<16x1xf32>
    %cst_152 = arith.constant 3.200000e+01 : f32
    %236 = vector.broadcast %cst_152 : f32 to vector<16x1xf32>
    %237 = arith.divf %235, %236 : vector<16x1xf32>
    %238 = vector.broadcast %230 : vector<16x1xf32> to vector<16x32xf32>
    %239 = arith.subf %222, %238 : vector<16x32xf32>
    %cst_153 = arith.constant 9.99999996E-13 : f32
    %240 = vector.broadcast %cst_153 : f32 to vector<16x1xf32>
    %241 = arith.addf %237, %240 : vector<16x1xf32>
    %242 = math.rsqrt %241 : vector<16x1xf32>
    %243 = vector.broadcast %242 : vector<16x1xf32> to vector<16x32xf32>
    %244 = arith.mulf %239, %243 : vector<16x32xf32>
    %245 = vector.broadcast %224 : vector<1x32xf32> to vector<16x32xf32>
    %246 = arith.mulf %244, %245 : vector<16x32xf32>
    %247 = vector.broadcast %226 : vector<1x32xf32> to vector<16x32xf32>
    %248 = arith.addf %246, %247 : vector<16x32xf32>
    %c0_154 = arith.constant 0 : index
    %c0_155 = arith.constant 0 : index
    %249 = vector.load %arg20[%c0_154, %c0_155] : memref<32x128xf32, #tpu.memory_space<vmem>>, vector<32x128xf32>
    %cst_156 = arith.constant dense<0.000000e+00> : vector<16x128xf32>
    %250 = tpu.matmul %248, %249, %cst_156 {dimension_numbers = #tpu.dot_dimension_numbers<[1], [0], [0], [1], [0, 0, 1, 1], [], []>} : vector<16x32xf32>, vector<32x128xf32>, vector<16x128xf32> -> vector<16x128xf32>
    %c0_157 = arith.constant 0 : index
    %c0_158 = arith.constant 0 : index
    %251 = vector.load %arg21[%c0_157, %c0_158] : memref<1x128xf32, #tpu.memory_space<vmem>>, vector<1x128xf32>
    %252 = vector.broadcast %251 : vector<1x128xf32> to vector<16x128xf32>
    %253 = arith.addf %250, %252 : vector<16x128xf32>
    %254 = vector.extract_strided_slice %253 {offsets = [0, 0], sizes = [16, 16], strides = [1, 1]} : vector<16x128xf32> to vector<16x16xf32>
    %255 = vector.extract_strided_slice %253 {offsets = [0, 16], sizes = [16, 2], strides = [1, 1]} : vector<16x128xf32> to vector<16x2xf32>
    %c0_159 = arith.constant 0 : index
    %c0_160 = arith.constant 0 : index
    %256 = vector.load %arg22[%c0_159, %c0_160] : memref<1x16xf32, #tpu.memory_space<vmem>>, vector<1x16xf32>
    %c0_161 = arith.constant 0 : index
    %c0_162 = arith.constant 0 : index
    %257 = vector.load %arg23[%c0_161, %c0_162] : memref<1x16xf32, #tpu.memory_space<vmem>>, vector<1x16xf32>
    %cst_163 = arith.constant dense<0.000000e+00> : vector<16xf32>
    %258 = vector.multi_reduction <add>, %254, %cst_163 [1] : vector<16x16xf32> to vector<16xf32>
    %259 = vector.shape_cast %258 : vector<16xf32> to vector<16x1xf32>
    %cst_164 = arith.constant 1.600000e+01 : f32
    %260 = vector.broadcast %cst_164 : f32 to vector<16x1xf32>
    %261 = arith.divf %259, %260 : vector<16x1xf32>
    %262 = vector.broadcast %261 : vector<16x1xf32> to vector<16x16xf32>
    %263 = arith.subf %254, %262 : vector<16x16xf32>
    %264 = arith.mulf %263, %263 : vector<16x16xf32>
    %cst_165 = arith.constant dense<0.000000e+00> : vector<16xf32>
    %265 = vector.multi_reduction <add>, %264, %cst_165 [1] : vector<16x16xf32> to vector<16xf32>
    %266 = vector.shape_cast %265 : vector<16xf32> to vector<16x1xf32>
    %cst_166 = arith.constant 1.600000e+01 : f32
    %267 = vector.broadcast %cst_166 : f32 to vector<16x1xf32>
    %268 = arith.divf %266, %267 : vector<16x1xf32>
    %269 = vector.broadcast %261 : vector<16x1xf32> to vector<16x16xf32>
    %270 = arith.subf %254, %269 : vector<16x16xf32>
    %cst_167 = arith.constant 9.99999974E-6 : f32
    %271 = vector.broadcast %cst_167 : f32 to vector<16x1xf32>
    %272 = arith.addf %268, %271 : vector<16x1xf32>
    %273 = math.rsqrt %272 : vector<16x1xf32>
    %274 = vector.broadcast %273 : vector<16x1xf32> to vector<16x16xf32>
    %275 = arith.mulf %270, %274 : vector<16x16xf32>
    %276 = vector.broadcast %256 : vector<1x16xf32> to vector<16x16xf32>
    %277 = arith.mulf %275, %276 : vector<16x16xf32>
    %278 = vector.broadcast %257 : vector<1x16xf32> to vector<16x16xf32>
    %279 = arith.addf %277, %278 : vector<16x16xf32>
    %cst_168 = arith.constant 0.000000e+00 : f32
    %280 = vector.broadcast %cst_168 : f32 to vector<16x16xf32>
    %281 = arith.maximumf %279, %280 : vector<16x16xf32>
    %282 = tpu.concatenate %281, %255 in 1 : vector<16x16xf32>, vector<16x2xf32> -> vector<16x18xf32>
    %c0_169 = arith.constant 0 : index
    %c0_170 = arith.constant 0 : index
    %283 = vector.load %arg24[%c0_169, %c0_170] : memref<18x128xf32, #tpu.memory_space<vmem>>, vector<18x128xf32>
    %cst_171 = arith.constant dense<0.000000e+00> : vector<16x128xf32>
    %284 = tpu.matmul %282, %283, %cst_171 {dimension_numbers = #tpu.dot_dimension_numbers<[1], [0], [0], [1], [0, 0, 1, 1], [], []>} : vector<16x18xf32>, vector<18x128xf32>, vector<16x128xf32> -> vector<16x128xf32>
    %c0_172 = arith.constant 0 : index
    %c0_173 = arith.constant 0 : index
    %285 = vector.load %arg25[%c0_172, %c0_173] : memref<1x128xf32, #tpu.memory_space<vmem>>, vector<1x128xf32>
    %286 = vector.broadcast %285 : vector<1x128xf32> to vector<16x128xf32>
    %287 = arith.addf %284, %286 : vector<16x128xf32>
    %c0_174 = arith.constant 0 : index
    %c0_175 = arith.constant 0 : index
    %288 = vector.load %arg26[%c0_174, %c0_175] : memref<16x128xf32, #tpu.memory_space<vmem>>, vector<16x128xf32>
    tpu.vector_store %arg26[%c0_174, %c0_175], %287 {strides = array<i32>} : memref<16x128xf32, #tpu.memory_space<vmem>>, vector<16x128xf32>,
    return
  }
}

</mosaic_0001>

<llo_original>
// kernel: pallas_forward.1
$region0: #{pallas_forward.1}
  #allocation0 [shape = 'u32[]', space=smem, size = 0x4, offset = 0x4, fixed_abs, tag = 'smem constant byte address 0x4 - core index']
  #allocation1 [shape = 'u32[72,128]{1,0:T(1,128)}', space=vmem, size = 0x9000, scoped, tag = 'internal scratch']
  %s0 = inlined_call_operand.vmem [shape: f32[16,32], index: 0, kind: input, shape index: {}]
  %s1 = inlined_call_operand.vmem [shape: f32[16,128], index: 1, kind: input, shape index: {}]
  %s2 = inlined_call_operand.vmem [shape: f32[128,16], index: 2, kind: input, shape index: {}]
  %s3 = inlined_call_operand.vmem [shape: f32[128,32], index: 3, kind: input, shape index: {}]
  %s4 = inlined_call_operand.vmem [shape: f32[128,128], index: 4, kind: input, shape index: {}]
  %s5 = inlined_call_operand.vmem [shape: f32[2,32,128], index: 5, kind: input, shape index: {}]
  %s6 = inlined_call_operand.vmem [shape: f32[2,1,128], index: 6, kind: input, shape index: {}]
  %s7 = inlined_call_operand.vmem [shape: f32[2,1,32], index: 7, kind: input, shape index: {}]
  %s8 = inlined_call_operand.vmem [shape: f32[2,32,32], index: 8, kind: input, shape index: {}]
  %s9 = inlined_call_operand.vmem [shape: f32[2,32,32], index: 9, kind: input, shape index: {}]
  %s10 = inlined_call_operand.vmem [shape: f32[2,32,32], index: 10, kind: input, shape index: {}]
  %s11 = inlined_call_operand.vmem [shape: f32[2,32,32], index: 11, kind: input, shape index: {}]
  %s12 = inlined_call_operand.vmem [shape: f32[2,1,32], index: 12, kind: input, shape index: {}]
  %s13 = inlined_call_operand.vmem [shape: f32[2,1,32], index: 13, kind: input, shape index: {}]
  %s14 = inlined_call_operand.vmem [shape: f32[2,32,64], index: 14, kind: input, shape index: {}]
  %s15 = inlined_call_operand.vmem [shape: f32[2,1,64], index: 15, kind: input, shape index: {}]
  %s16 = inlined_call_operand.vmem [shape: f32[2,64,32], index: 16, kind: input, shape index: {}]
  %s17 = inlined_call_operand.vmem [shape: f32[2,1,32], index: 17, kind: input, shape index: {}]
  %s18 = inlined_call_operand.vmem [shape: f32[2,1,32], index: 18, kind: input, shape index: {}]
  %s19 = inlined_call_operand.vmem [shape: f32[2,1,32], index: 19, kind: input, shape index: {}]
  %s20 = inlined_call_operand.vmem [shape: f32[32,128], index: 20, kind: input, shape index: {}]
  %s21 = inlined_call_operand.vmem [shape: f32[1,128], index: 21, kind: input, shape index: {}]
  %s22 = inlined_call_operand.vmem [shape: f32[1,16], index: 22, kind: input, shape index: {}]
  %s23 = inlined_call_operand.vmem [shape: f32[1,16], index: 23, kind: input, shape index: {}]
  %s24 = inlined_call_operand.vmem [shape: f32[18,128], index: 24, kind: input, shape index: {}]
  %s25 = inlined_call_operand.vmem [shape: f32[1,128], index: 25, kind: input, shape index: {}]
  %s26 = inlined_call_operand.vmem [shape: f32[16,128], index: 26, kind: output, shape index: {}]
  %s27 = sld [smem:[#allocation0]]
  $region114: #{pallas_forward.1} parent=0
    _
  %s29 = ssub.s32 1, %s27
  %s30 = scalar_select 0, %s29, %s27
  // Predicated region
  $region2: #{pallas_forward.1} parent=0 // pred_check
    _
  $region3: #{pallas_forward.1} parent=0 // pred_check_branch
    %32 = sbr.rel (0) target = $region5
  $region4: #{pallas_forward.1} parent=0 // pred_region
    _
  $region5: #{pallas_forward.1} parent=0 // pred_fallthru
    _
  // Predicated region
  $region6: #{pallas_forward.1} parent=0 // pred_check
    _
  $region7: #{pallas_forward.1} parent=0 // pred_check_branch
    %34 = sbr.rel (0) target = $region9
  $region8: #{pallas_forward.1} parent=0 // pred_region
    _
  $region9: #{pallas_forward.1} parent=0 // pred_fallthru
    _
  // Predicated region
  $region10: #{pallas_forward.1} parent=0 // pred_check
    _
  $region11: #{pallas_forward.1} parent=0 // pred_check_branch
    %36 = sbr.rel (0) target = $region13
  $region12: #{pallas_forward.1} parent=0 // pred_region
    _
  $region13: #{pallas_forward.1} parent=0 // pred_fallthru
    _
  // Predicated region
  $region14: #{pallas_forward.1} parent=0 // pred_check
    _
  $region15: #{pallas_forward.1} parent=0 // pred_check_branch
    %38 = sbr.rel (0) target = $region17
  $region16: #{pallas_forward.1} parent=0 // pred_region
    _
  $region17: #{pallas_forward.1} parent=0 // pred_fallthru
    _
  // Predicated region
  $region18: #{pallas_forward.1} parent=0 // pred_check
    _
  $region19: #{pallas_forward.1} parent=0 // pred_check_branch
    %40 = sbr.rel (0) target = $region21
  $region20: #{pallas_forward.1} parent=0 // pred_region
    _
  $region21: #{pallas_forward.1} parent=0 // pred_fallthru
    _
  // Predicated region
  $region22: #{pallas_forward.1} parent=0 // pred_check
    _
  $region23: #{pallas_forward.1} parent=0 // pred_check_branch
    %42 = sbr.rel (0) target = $region25
  $region24: #{pallas_forward.1} parent=0 // pred_region
    _
  $region25: #{pallas_forward.1} parent=0 // pred_fallthru
    _
  // Predicated region
  $region26: #{pallas_forward.1} parent=0 // pred_check
    _
  $region27: #{pallas_forward.1} parent=0 // pred_check_branch
    %44 = sbr.rel (0) target = $region29
  $region28: #{pallas_forward.1} parent=0 // pred_region
    _
  $region29: #{pallas_forward.1} parent=0 // pred_fallthru
    _
  // Predicated region
  $region30: #{pallas_forward.1} parent=0 // pred_check
    _
  $region31: #{pallas_forward.1} parent=0 // pred_check_branch
    %46 = sbr.rel (0) target = $region33
  $region32: #{pallas_forward.1} parent=0 // pred_region
    _
  $region33: #{pallas_forward.1} parent=0 // pred_fallthru
    _
  // Predicated region
  $region34: #{pallas_forward.1} parent=0 // pred_check
    _
  $region35: #{pallas_forward.1} parent=0 // pred_check_branch
    %48 = sbr.rel (0) target = $region37
  $region36: #{pallas_forward.1} parent=0 // pred_region
    _
  $region37: #{pallas_forward.1} parent=0 // pred_fallthru
    _
  // Predicated region
  $region38: #{pallas_forward.1} parent=0 // pred_check
    _
  $region39: #{pallas_forward.1} parent=0 // pred_check_branch
    %50 = sbr.rel (0) target = $region41
  $region40: #{pallas_forward.1} parent=0 // pred_region
    _
  $region41: #{pallas_forward.1} parent=0 // pred_fallthru
    _
  // Predicated region
  $region42: #{pallas_forward.1} parent=0 // pred_check
    _
  $region43: #{pallas_forward.1} parent=0 // pred_check_branch
    %52 = sbr.rel (0) target = $region45
  $region44: #{pallas_forward.1} parent=0 // pred_region
    _
  $region45: #{pallas_forward.1} parent=0 // pred_fallthru
    _
  // Predicated region
  $region46: #{pallas_forward.1} parent=0 // pred_check
    _
  $region47: #{pallas_forward.1} parent=0 // pred_check_branch
    %54 = sbr.rel (0) target = $region49
  $region48: #{pallas_forward.1} parent=0 // pred_region
    _
  $region49: #{pallas_forward.1} parent=0 // pred_fallthru
    _
  // Predicated region
  $region50: #{pallas_forward.1} parent=0 // pred_check
    _
  $region51: #{pallas_forward.1} parent=0 // pred_check_branch
    %56 = sbr.rel (0) target = $region53
  $region52: #{pallas_forward.1} parent=0 // pred_region
    _
  $region53: #{pallas_forward.1} parent=0 // pred_fallthru
    _
  // Predicated region
  $region54: #{pallas_forward.1} parent=0 // pred_check
    _
  $region55: #{pallas_forward.1} parent=0 // pred_check_branch
    %58 = sbr.rel (0) target = $region57
  $region56: #{pallas_forward.1} parent=0 // pred_region
    _
  $region57: #{pallas_forward.1} parent=0 // pred_fallthru
    _
  // Predicated region
  $region58: #{pallas_forward.1} parent=0 // pred_check
    _
  $region59: #{pallas_forward.1} parent=0 // pred_check_branch
    %60 = sbr.rel (0) target = $region61
  $region60: #{pallas_forward.1} parent=0 // pred_region
    _
  $region61: #{pallas_forward.1} parent=0 // pred_fallthru
    _
  // Predicated region
  $region62: #{pallas_forward.1} parent=0 // pred_check
    _
  $region63: #{pallas_forward.1} parent=0 // pred_check_branch
    %62 = sbr.rel (0) target = $region65
  $region64: #{pallas_forward.1} parent=0 // pred_region
    _
  $region65: #{pallas_forward.1} parent=0 // pred_fallthru
    _
  // Predicated region
  $region66: #{pallas_forward.1} parent=0 // pred_check
    _
  $region67: #{pallas_forward.1} parent=0 // pred_check_branch
    %64 = sbr.rel (0) target = $region69
  $region68: #{pallas_forward.1} parent=0 // pred_region
    _
  $region69: #{pallas_forward.1} parent=0 // pred_fallthru
    _
  // Predicated region
  $region70: #{pallas_forward.1} parent=0 // pred_check
    _
  $region71: #{pallas_forward.1} parent=0 // pred_check_branch
    %66 = sbr.rel (0) target = $region73
  $region72: #{pallas_forward.1} parent=0 // pred_region
    _
  $region73: #{pallas_forward.1} parent=0 // pred_fallthru
    _
  // Predicated region
  $region74: #{pallas_forward.1} parent=0 // pred_check
    _
  $region75: #{pallas_forward.1} parent=0 // pred_check_branch
    %68 = sbr.rel (0) target = $region77
  $region76: #{pallas_forward.1} parent=0 // pred_region
    _
  $region77: #{pallas_forward.1} parent=0 // pred_fallthru
    _
  // Predicated region
  $region78: #{pallas_forward.1} parent=0 // pred_check
    _
  $region79: #{pallas_forward.1} parent=0 // pred_check_branch
    %70 = sbr.rel (0) target = $region81
  $region80: #{pallas_forward.1} parent=0 // pred_region
    _
  $region81: #{pallas_forward.1} parent=0 // pred_fallthru
    _
  // Predicated region
  $region82: #{pallas_forward.1} parent=0 // pred_check
    _
  $region83: #{pallas_forward.1} parent=0 // pred_check_branch
    %72 = sbr.rel (0) target = $region85
  $region84: #{pallas_forward.1} parent=0 // pred_region
    _
  $region85: #{pallas_forward.1} parent=0 // pred_fallthru
    _
  // Predicated region
  $region86: #{pallas_forward.1} parent=0 // pred_check
    _
  $region87: #{pallas_forward.1} parent=0 // pred_check_branch
    %74 = sbr.rel (0) target = $region89
  $region88: #{pallas_forward.1} parent=0 // pred_region
    _
  $region89: #{pallas_forward.1} parent=0 // pred_fallthru
    _
  // Predicated region
  $region90: #{pallas_forward.1} parent=0 // pred_check
    _
  $region91: #{pallas_forward.1} parent=0 // pred_check_branch
    %76 = sbr.rel (0) target = $region93
  $region92: #{pallas_forward.1} parent=0 // pred_region
    _
  $region93: #{pallas_forward.1} parent=0 // pred_fallthru
    _
  // Predicated region
  $region94: #{pallas_forward.1} parent=0 // pred_check
    _
  $region95: #{pallas_forward.1} parent=0 // pred_check_branch
    %78 = sbr.rel (0) target = $region97
  $region96: #{pallas_forward.1} parent=0 // pred_region
    _
  $region97: #{pallas_forward.1} parent=0 // pred_fallthru
    _
  // Predicated region
  $region98: #{pallas_forward.1} parent=0 // pred_check
    _
  $region99: #{pallas_forward.1} parent=0 // pred_check_branch
    %80 = sbr.rel (0) target = $region101
  $region100: #{pallas_forward.1} parent=0 // pred_region
    _
  $region101: #{pallas_forward.1} parent=0 // pred_fallthru
    _
  // Predicated region
  $region102: #{pallas_forward.1} parent=0 // pred_check
    _
  $region103: #{pallas_forward.1} parent=0 // pred_check_branch
    %82 = sbr.rel (0) target = $region105
  $region104: #{pallas_forward.1} parent=0 // pred_region
    _
  $region105: #{pallas_forward.1} parent=0 // pred_fallthru
    _
  %v83 = vld [vmem:[%s0] sm:$0xff]
  %v84 = vld [vmem:[%s0 + $0x8] sm:$0xff]
  %v85 = vld [vmem:[%s1] sm:$0xff]
  %v86 = vld [vmem:[%s1 + $0x8] sm:$0xff]
  %v87 = vld [vmem:[%s2] sm:$0xff]
  %v88 = vld [vmem:[%s2 + $0x8] sm:$0xff]
  %v89 = vld [vmem:[%s2 + $0x10] sm:$0xff]
  %v90 = vld [vmem:[%s2 + $0x18] sm:$0xff]
  %v91 = vld [vmem:[%s2 + $0x20] sm:$0xff]
  %v92 = vld [vmem:[%s2 + $0x28] sm:$0xff]
  %v93 = vld [vmem:[%s2 + $0x30] sm:$0xff]
  %v94 = vld [vmem:[%s2 + $0x38] sm:$0xff]
  %v95 = vld [vmem:[%s2 + $0x40] sm:$0xff]
  %v96 = vld [vmem:[%s2 + $0x48] sm:$0xff]
  %v97 = vld [vmem:[%s2 + $0x50] sm:$0xff]
  %v98 = vld [vmem:[%s2 + $0x58] sm:$0xff]
  %v99 = vld [vmem:[%s2 + $0x60] sm:$0xff]
  %v100 = vld [vmem:[%s2 + $0x68] sm:$0xff]
  %v101 = vld [vmem:[%s2 + $0x70] sm:$0xff]
  %v102 = vld [vmem:[%s2 + $0x78] sm:$0xff]
  %v103 = vld [vmem:[%s3] sm:$0xff]
  %v104 = vld [vmem:[%s3 + $0x8] sm:$0xff]
  %v105 = vld [vmem:[%s3 + $0x10] sm:$0xff]
  %v106 = vld [vmem:[%s3 + $0x18] sm:$0xff]
  %v107 = vld [vmem:[%s3 + $0x20] sm:$0xff]
  %v108 = vld [vmem:[%s3 + $0x28] sm:$0xff]
  %v109 = vld [vmem:[%s3 + $0x30] sm:$0xff]
  %v110 = vld [vmem:[%s3 + $0x38] sm:$0xff]
  %v111 = vld [vmem:[%s3 + $0x40] sm:$0xff]
  %v112 = vld [vmem:[%s3 + $0x48] sm:$0xff]
  %v113 = vld [vmem:[%s3 + $0x50] sm:$0xff]
  %v114 = vld [vmem:[%s3 + $0x58] sm:$0xff]
  %v115 = vld [vmem:[%s3 + $0x60] sm:$0xff]
  %v116 = vld [vmem:[%s3 + $0x68] sm:$0xff]
  %v117 = vld [vmem:[%s3 + $0x70] sm:$0xff]
  %v118 = vld [vmem:[%s3 + $0x78] sm:$0xff]
  %v119 = vld [vmem:[%s4] sm:$0xff]
  %v120 = vld [vmem:[%s4 + $0x8] sm:$0xff]
  %v121 = vld [vmem:[%s4 + $0x10] sm:$0xff]
  %v122 = vld [vmem:[%s4 + $0x18] sm:$0xff]
  %v123 = vld [vmem:[%s4 + $0x20] sm:$0xff]
  %v124 = vld [vmem:[%s4 + $0x28] sm:$0xff]
  %v125 = vld [vmem:[%s4 + $0x30] sm:$0xff]
  %v126 = vld [vmem:[%s4 + $0x38] sm:$0xff]
  %v127 = vld [vmem:[%s4 + $0x40] sm:$0xff]
  %v128 = vld [vmem:[%s4 + $0x48] sm:$0xff]
  %v129 = vld [vmem:[%s4 + $0x50] sm:$0xff]
  %v130 = vld [vmem:[%s4 + $0x58] sm:$0xff]
  %v131 = vld [vmem:[%s4 + $0x60] sm:$0xff]
  %v132 = vld [vmem:[%s4 + $0x68] sm:$0xff]
  %v133 = vld [vmem:[%s4 + $0x70] sm:$0xff]
  %v134 = vld [vmem:[%s4 + $0x78] sm:$0xff]
  %v135 = vld [vmem:[%s8] sm:$0xff]
  %v136 = vld [vmem:[%s8 + $0x8] sm:$0xff]
  %v137 = vld [vmem:[%s8 + $0x10] sm:$0xff]
  %v138 = vld [vmem:[%s8 + $0x18] sm:$0xff]
  %vm139 = vcmask 261120
  %v141 = vsel %vm139, %v83, 0
  %v144 = vsel %vm139, %v84, 0
  %146 = vmatpush.msra.mxu0 0.0
  %147 = vmatpush.msra.mxu0 0.0
  %148 = vmatpush.msra.mxu0 0.0
  %149 = vmatpush.msra.mxu0 0.0
  %150 = vmatpush.msra.mxu0 0.0
  %151 = vmatpush.msra.mxu0 0.0
  %152 = vmatpush.msra.mxu0 0.0
  %153 = vmatpush.msra.mxu0 0.0
  %154 = vmatpush.msra.mxu0 0.0
  %155 = vmatpush.msra.mxu0 0.0
  %156 = vmatpush.msra.mxu0 0.0
  %157 = vmatpush.msra.mxu0 0.0
  %158 = vmatpush.msra.mxu0 %v138
  %159 = vmatpush.msra.mxu0 %v137
  %160 = vmatpush.msra.mxu0 %v136
  %161 = vmatpush.msra.mxu0 %v135
  %162 = vmatmul.f32.gmra.mxu0 %v141
  %v163 = vpop.f32.mrf.mxu0
  %v164 = vadd.f32 0.0, %v163
  %165 = vmatmul.f32.gmra.mxu0 %v144
  %v166 = vpop.f32.mrf.mxu0
  %v167 = vadd.f32 0.0, %v166
  %168 = vdwg.mxu0
  %v169 = vld [vmem:[%s9] sm:$0xff]
  %v170 = vld [vmem:[%s9 + $0x8] sm:$0xff]
  %v171 = vld [vmem:[%s9 + $0x10] sm:$0xff]
  %v172 = vld [vmem:[%s9 + $0x18] sm:$0xff]
  %173 = vmatpush.msra.mxu0 0.0
  %174 = vmatpush.msra.mxu0 0.0
  %175 = vmatpush.msra.mxu0 0.0
  %176 = vmatpush.msra.mxu0 0.0
  %177 = vmatpush.msra.mxu0 0.0
  %178 = vmatpush.msra.mxu0 0.0
  %179 = vmatpush.msra.mxu0 0.0
  %180 = vmatpush.msra.mxu0 0.0
  %181 = vmatpush.msra.mxu0 0.0
  %182 = vmatpush.msra.mxu0 0.0
  %183 = vmatpush.msra.mxu0 0.0
  %184 = vmatpush.msra.mxu0 0.0
  %185 = vmatpush.msra.mxu0 %v172
  %186 = vmatpush.msra.mxu0 %v171
  %187 = vmatpush.msra.mxu0 %v170
  %188 = vmatpush.msra.mxu0 %v169
  %189 = vmatmul.f32.gmra.mxu0 %v141
  %v190 = vpop.f32.mrf.mxu0
  %v191 = vadd.f32 0.0, %v190
  %192 = vmatmul.f32.gmra.mxu0 %v144
  %v193 = vpop.f32.mrf.mxu0
  %v194 = vadd.f32 0.0, %v193
  %195 = vdwg.mxu0
  %v196 = vld [vmem:[%s10] sm:$0xff]
  %v197 = vld [vmem:[%s10 + $0x8] sm:$0xff]
  %v198 = vld [vmem:[%s10 + $0x10] sm:$0xff]
  %v199 = vld [vmem:[%s10 + $0x18] sm:$0xff]
  %200 = vmatpush.msra.mxu0 0.0
  %201 = vmatpush.msra.mxu0 0.0
  %202 = vmatpush.msra.mxu0 0.0
  %203 = vmatpush.msra.mxu0 0.0
  %204 = vmatpush.msra.mxu0 0.0
  %205 = vmatpush.msra.mxu0 0.0
  %206 = vmatpush.msra.mxu0 0.0
  %207 = vmatpush.msra.mxu0 0.0
  %208 = vmatpush.msra.mxu0 0.0
  %209 = vmatpush.msra.mxu0 0.0
  %210 = vmatpush.msra.mxu0 0.0
  %211 = vmatpush.msra.mxu0 0.0
  %212 = vmatpush.msra.mxu0 %v199
  %213 = vmatpush.msra.mxu0 %v198
  %214 = vmatpush.msra.mxu0 %v197
  %215 = vmatpush.msra.mxu0 %v196
  %216 = vmatmul.f32.gmra.mxu0 %v141
  %v217 = vpop.f32.mrf.mxu0
  %v218 = vadd.f32 0.0, %v217
  %219 = vmatmul.f32.gmra.mxu0 %v144
  %v220 = vpop.f32.mrf.mxu0
  %v221 = vadd.f32 0.0, %v220
  %222 = vdwg.mxu0
  %vm223 = vcmask 130048
  %v225 = vsel %vm223, %v87, 0
  %v228 = vsel %vm223, %v88, 0
  %v231 = vsel %vm223, %v89, 0
  %v234 = vsel %vm223, %v90, 0
  %v237 = vsel %vm223, %v91, 0
  %v240 = vsel %vm223, %v92, 0
  %v243 = vsel %vm223, %v93, 0
  %v246 = vsel %vm223, %v94, 0
  %v249 = vsel %vm223, %v95, 0
  %v252 = vsel %vm223, %v96, 0
  %v255 = vsel %vm223, %v97, 0
  %v258 = vsel %vm223, %v98, 0
  %v261 = vsel %vm223, %v99, 0
  %v264 = vsel %vm223, %v100, 0
  %v267 = vsel %vm223, %v101, 0
  %v270 = vsel %vm223, %v102, 0
  %272 = vmatpush.msra.mxu0 0.0
  %273 = vmatpush.msra.mxu0 0.0
  %274 = vmatpush.msra.mxu0 0.0
  %275 = vmatpush.msra.mxu0 0.0
  %276 = vmatpush.msra.mxu0 0.0
  %277 = vmatpush.msra.mxu0 0.0
  %278 = vmatpush.msra.mxu0 0.0
  %279 = vmatpush.msra.mxu0 0.0
  %280 = vmatpush.msra.mxu0 0.0
  %281 = vmatpush.msra.mxu0 0.0
  %282 = vmatpush.msra.mxu0 0.0
  %283 = vmatpush.msra.mxu0 0.0
  %284 = vmatpush.msra.mxu0 0.0
  %285 = vmatpush.msra.mxu0 0.0
  %286 = vmatpush.msra.mxu0 %v194
  %287 = vmatpush.msra.mxu0 %v191
  %288 = vmatmul.f32.gmra.mxu0 %v225
  %v289 = vpop.f32.mrf.mxu0
  %v290 = vadd.f32 0.0, %v289
  %291 = vmatmul.f32.gmra.mxu0 %v228
  %v292 = vpop.f32.mrf.mxu0
  %v293 = vadd.f32 0.0, %v292
  %294 = vmatmul.f32.gmra.mxu0 %v231
  %v295 = vpop.f32.mrf.mxu0
  %v296 = vadd.f32 0.0, %v295
  %297 = vmatmul.f32.gmra.mxu0 %v234
  %v298 = vpop.f32.mrf.mxu0
  %v299 = vadd.f32 0.0, %v298
  %300 = vmatmul.f32.gmra.mxu0 %v237
  %v301 = vpop.f32.mrf.mxu0
  %v302 = vadd.f32 0.0, %v301
  %303 = vmatmul.f32.gmra.mxu0 %v240
  %v304 = vpop.f32.mrf.mxu0
  %v305 = vadd.f32 0.0, %v304
  %306 = vmatmul.f32.gmra.mxu0 %v243
  %v307 = vpop.f32.mrf.mxu0
  %v308 = vadd.f32 0.0, %v307
  %309 = vmatmul.f32.gmra.mxu0 %v246
  %v310 = vpop.f32.mrf.mxu0
  %v311 = vadd.f32 0.0, %v310
  %312 = vmatmul.f32.gmra.mxu0 %v249
  %v313 = vpop.f32.mrf.mxu0
  %v314 = vadd.f32 0.0, %v313
  %315 = vmatmul.f32.gmra.mxu0 %v252
  %v316 = vpop.f32.mrf.mxu0
  %v317 = vadd.f32 0.0, %v316
  %318 = vmatmul.f32.gmra.mxu0 %v255
  %v319 = vpop.f32.mrf.mxu0
  %v320 = vadd.f32 0.0, %v319
  %321 = vmatmul.f32.gmra.mxu0 %v258
  %v322 = vpop.f32.mrf.mxu0
  %v323 = vadd.f32 0.0, %v322
  %324 = vmatmul.f32.gmra.mxu0 %v261
  %v325 = vpop.f32.mrf.mxu0
  %v326 = vadd.f32 0.0, %v325
  %327 = vmatmul.f32.gmra.mxu0 %v264
  %v328 = vpop.f32.mrf.mxu0
  %v329 = vadd.f32 0.0, %v328
  %330 = vmatmul.f32.gmra.mxu0 %v267
  %v331 = vpop.f32.mrf.mxu0
  %v332 = vadd.f32 0.0, %v331
  %333 = vmatmul.f32.gmra.mxu0 %v270
  %v334 = vpop.f32.mrf.mxu0
  %v335 = vadd.f32 0.0, %v334
  %336 = vdwg.mxu0
  %v337 = vmul.f32 %v290, %v103
  %v338 = vmul.f32 %v293, %v104
  %v339 = vmul.f32 %v296, %v105
  %v340 = vmul.f32 %v299, %v106
  %v341 = vmul.f32 %v302, %v107
  %v342 = vmul.f32 %v305, %v108
  %v343 = vmul.f32 %v308, %v109
  %v344 = vmul.f32 %v311, %v110
  %v345 = vmul.f32 %v314, %v111
  %v346 = vmul.f32 %v317, %v112
  %v347 = vmul.f32 %v320, %v113
  %v348 = vmul.f32 %v323, %v114
  %v349 = vmul.f32 %v326, %v115
  %v350 = vmul.f32 %v329, %v116
  %v351 = vmul.f32 %v332, %v117
  %v352 = vmul.f32 %v335, %v118
  %353 = vmatpush.msra.mxu0 0.0
  %354 = vmatpush.msra.mxu0 0.0
  %355 = vmatpush.msra.mxu0 0.0
  %356 = vmatpush.msra.mxu0 0.0
  %357 = vmatpush.msra.mxu0 0.0
  %358 = vmatpush.msra.mxu0 0.0
  %359 = vmatpush.msra.mxu0 0.0
  %360 = vmatpush.msra.mxu0 0.0
  %361 = vmatpush.msra.mxu0 0.0
  %362 = vmatpush.msra.mxu0 0.0
  %363 = vmatpush.msra.mxu0 0.0
  %364 = vmatpush.msra.mxu0 0.0
  %365 = vmatpush.msra.mxu0 0.0
  %366 = vmatpush.msra.mxu0 0.0
  %367 = vmatpush.msra.mxu0 %v221
  %368 = vmatpush.msra.mxu0 %v218
  %369 = vmatmul.f32.gmra.mxu0 %v225
  %v370 = vpop.f32.mrf.mxu0
  %v371 = vadd.f32 0.0, %v370
  %372 = vmatmul.f32.gmra.mxu0 %v228
  %v373 = vpop.f32.mrf.mxu0
  %v374 = vadd.f32 0.0, %v373
  %375 = vmatmul.f32.gmra.mxu0 %v231
  %v376 = vpop.f32.mrf.mxu0
  %v377 = vadd.f32 0.0, %v376
  %378 = vmatmul.f32.gmra.mxu0 %v234
  %v379 = vpop.f32.mrf.mxu0
  %v380 = vadd.f32 0.0, %v379
  %381 = vmatmul.f32.gmra.mxu0 %v237
  %v382 = vpop.f32.mrf.mxu0
  %v383 = vadd.f32 0.0, %v382
  %384 = vmatmul.f32.gmra.mxu0 %v240
  %v385 = vpop.f32.mrf.mxu0
  %v386 = vadd.f32 0.0, %v385
  %387 = vmatmul.f32.gmra.mxu0 %v243
  %v388 = vpop.f32.mrf.mxu0
  %v389 = vadd.f32 0.0, %v388
  %390 = vmatmul.f32.gmra.mxu0 %v246
  %v391 = vpop.f32.mrf.mxu0
  %v392 = vadd.f32 0.0, %v391
  %393 = vmatmul.f32.gmra.mxu0 %v249
  %v394 = vpop.f32.mrf.mxu0
  %v395 = vadd.f32 0.0, %v394
  %396 = vmatmul.f32.gmra.mxu0 %v252
  %v397 = vpop.f32.mrf.mxu0
  %v398 = vadd.f32 0.0, %v397
  %399 = vmatmul.f32.gmra.mxu0 %v255
  %v400 = vpop.f32.mrf.mxu0
  %v401 = vadd.f32 0.0, %v400
  %402 = vmatmul.f32.gmra.mxu0 %v258
  %v403 = vpop.f32.mrf.mxu0
  %v404 = vadd.f32 0.0, %v403
  %405 = vmatmul.f32.gmra.mxu0 %v261
  %v406 = vpop.f32.mrf.mxu0
  %v407 = vadd.f32 0.0, %v406
  %408 = vmatmul.f32.gmra.mxu0 %v264
  %v409 = vpop.f32.mrf.mxu0
  %v410 = vadd.f32 0.0, %v409
  %411 = vmatmul.f32.gmra.mxu0 %v267
  %v412 = vpop.f32.mrf.mxu0
  %v413 = vadd.f32 0.0, %v412
  %414 = vmatmul.f32.gmra.mxu0 %v270
  %v415 = vpop.f32.mrf.mxu0
  %v416 = vadd.f32 0.0, %v415
  %417 = vdwg.mxu0
  %v418 = vmul.f32 %v371, %v103
  %v419 = vmul.f32 %v374, %v104
  %v420 = vmul.f32 %v377, %v105
  %v421 = vmul.f32 %v380, %v106
  %v422 = vmul.f32 %v383, %v107
  %v423 = vmul.f32 %v386, %v108
  %v424 = vmul.f32 %v389, %v109
  %v425 = vmul.f32 %v392, %v110
  %v426 = vmul.f32 %v395, %v111
  %v427 = vmul.f32 %v398, %v112
  %v428 = vmul.f32 %v401, %v113
  %v429 = vmul.f32 %v404, %v114
  %v430 = vmul.f32 %v407, %v115
  %v431 = vmul.f32 %v410, %v116
  %v432 = vmul.f32 %v413, %v117
  %v433 = vmul.f32 %v416, %v118
  %v434 = vld [vmem:[%s7] sm:$0x1]
  %v436 = vperm.slane %v434, 0
  %v438 = vadd.f32 %v164, %v436
  %v439 = vadd.f32 %v167, %v436
  %v440 = vld [vmem:[%s5] sm:$0xff]
  %v441 = vld [vmem:[%s5 + $0x8] sm:$0xff]
  %v442 = vld [vmem:[%s5 + $0x10] sm:$0xff]
  %v443 = vld [vmem:[%s5 + $0x18] sm:$0xff]
  %v444 = vld [vmem:[%s6] sm:$0x1]
  %v446 = vperm.slane %v444, 0
  %v449 = vsel %vm139, %v164, 0
  %v452 = vsel %vm139, %v167, 0
  %454 = vmatpush.msra.mxu0 0.0
  %455 = vmatpush.msra.mxu0 0.0
  %456 = vmatpush.msra.mxu0 0.0
  %457 = vmatpush.msra.mxu0 0.0
  %458 = vmatpush.msra.mxu0 0.0
  %459 = vmatpush.msra.mxu0 0.0
  %460 = vmatpush.msra.mxu0 0.0
  %461 = vmatpush.msra.mxu0 0.0
  %462 = vmatpush.msra.mxu0 0.0
  %463 = vmatpush.msra.mxu0 0.0
  %464 = vmatpush.msra.mxu0 0.0
  %465 = vmatpush.msra.mxu0 0.0
  %466 = vmatpush.msra.mxu0 %v443
  %467 = vmatpush.msra.mxu0 %v442
  %468 = vmatpush.msra.mxu0 %v441
  %469 = vmatpush.msra.mxu0 %v440
  %470 = vmatmul.f32.gmra.mxu0 %v449
  %v471 = vpop.f32.mrf.mxu0
  %v472 = vadd.f32 %v446, %v471
  %473 = vmatmul.f32.gmra.mxu0 %v452
  %v474 = vpop.f32.mrf.mxu0
  %v475 = vadd.f32 %v446, %v474
  %476 = vdwg.mxu0
  %s478 = sor.u32 256, 120
  %479 = vrot.lane.b32.xlu0 %v472, %s478
  %v480 = vpop.permute.xlu0 %479
  %s482 = sor.u32 256, 120
  %483 = vrot.lane.b32.xlu0 %v475, %s482
  %v484 = vpop.permute.xlu0 %483
  %v486 = vsel %vm139, %v438, 0
  %v489 = vsel %vm139, %v439, 0
  %v492 = vsel %vm139, %v337, 0
  %v495 = vsel %vm139, %v338, 0
  %v498 = vsel %vm139, %v339, 0
  %v501 = vsel %vm139, %v340, 0
  %v504 = vsel %vm139, %v341, 0
  %v507 = vsel %vm139, %v342, 0
  %v510 = vsel %vm139, %v343, 0
  %v513 = vsel %vm139, %v344, 0
  %v516 = vsel %vm139, %v345, 0
  %v519 = vsel %vm139, %v346, 0
  %v522 = vsel %vm139, %v347, 0
  %v525 = vsel %vm139, %v348, 0
  %v528 = vsel %vm139, %v349, 0
  %v531 = vsel %vm139, %v350, 0
  %v534 = vsel %vm139, %v351, 0
  %v537 = vsel %vm139, %v352, 0
  %539 = vmatpush.xpose.msra.mxu0 %v537
  %540 = vmatpush.xpose.msra.mxu0 %v534
  %541 = vmatpush.xpose.msra.mxu0 %v531
  %542 = vmatpush.xpose.msra.mxu0 %v528
  %543 = vmatpush.xpose.msra.mxu0 %v525
  %544 = vmatpush.xpose.msra.mxu0 %v522
  %545 = vmatpush.xpose.msra.mxu0 %v519
  %546 = vmatpush.xpose.msra.mxu0 %v516
  %547 = vmatpush.xpose.msra.mxu0 %v513
  %548 = vmatpush.xpose.msra.mxu0 %v510
  %549 = vmatpush.xpose.msra.mxu0 %v507
  %550 = vmatpush.xpose.msra.mxu0 %v504
  %551 = vmatpush.xpose.msra.mxu0 %v501
  %552 = vmatpush.xpose.msra.mxu0 %v498
  %553 = vmatpush.xpose.msra.mxu0 %v495
  %554 = vmatpush.xpose.msra.mxu0 %v492
  %555 = vmatmul.f32.gmra.mxu0 %v486
  %v556 = vpop.f32.mrf.mxu0
  %v557 = vadd.f32 %v480, %v556
  %558 = vmatmul.f32.gmra.mxu0 %v489
  %v559 = vpop.f32.mrf.mxu0
  %v560 = vadd.f32 %v484, %v559
  %561 = vdwg.mxu0
  %v562 = vadd.f32 %v557, %v85
  %v563 = vadd.f32 %v560, %v86
  %564 = vmax.xlane.f32.xlu0 %v562
  %v565 = vpop.xlane.xlu0 %564
  %566 = vmax.xlane.f32.xlu0 %v563
  %v567 = vpop.xlane.xlu0 %566
  %v568 = vsub.f32 %v562, %v565
  %v569 = vsub.f32 %v563, %v567
  %v570 = vmul.f32 %v568, 1.442695
  %v571 = vpow.pop %v570
  %v572 = vmul.f32 %v569, 1.442695
  %v573 = vpow.pop %v572
  %574 = vmatpush.msra.mxu0 %v134
  %575 = vmatpush.msra.mxu0 %v133
  %576 = vmatpush.msra.mxu0 %v132
  %577 = vmatpush.msra.mxu0 %v131
  %578 = vmatpush.msra.mxu0 %v130
  %579 = vmatpush.msra.mxu0 %v129
  %580 = vmatpush.msra.mxu0 %v128
  %581 = vmatpush.msra.mxu0 %v127
  %582 = vmatpush.msra.mxu0 %v126
  %583 = vmatpush.msra.mxu0 %v125
  %584 = vmatpush.msra.mxu0 %v124
  %585 = vmatpush.msra.mxu0 %v123
  %586 = vmatpush.msra.mxu0 %v122
  %587 = vmatpush.msra.mxu0 %v121
  %588 = vmatpush.msra.mxu0 %v120
  %589 = vmatpush.msra.mxu0 %v119
  %590 = vmatmul.f32.gmra.mxu0 %v571
  %v591 = vpop.f32.mrf.mxu0
  %v592 = vadd.f32 1e-30, %v591
  %593 = vmatmul.f32.gmra.mxu0 %v573
  %v594 = vpop.f32.mrf.mxu0
  %v595 = vadd.f32 1e-30, %v594
  %596 = vdwg.mxu0
  %v597 = vrcp.pop %v592
  %v598 = vrcp.pop %v595
  %v599 = vmul.f32 %v571, %v597
  %v600 = vmul.f32 %v573, %v598
  %601 = vmatpush.msra.mxu0 %v433
  %602 = vmatpush.msra.mxu0 %v432
  %603 = vmatpush.msra.mxu0 %v431
  %604 = vmatpush.msra.mxu0 %v430
  %605 = vmatpush.msra.mxu0 %v429
  %606 = vmatpush.msra.mxu0 %v428
  %607 = vmatpush.msra.mxu0 %v427
  %608 = vmatpush.msra.mxu0 %v426
  %609 = vmatpush.msra.mxu0 %v425
  %610 = vmatpush.msra.mxu0 %v424
  %611 = vmatpush.msra.mxu0 %v423
  %612 = vmatpush.msra.mxu0 %v422
  %613 = vmatpush.msra.mxu0 %v421
  %614 = vmatpush.msra.mxu0 %v420
  %615 = vmatpush.msra.mxu0 %v419
  %616 = vmatpush.msra.mxu0 %v418
  %617 = vmatmul.f32.gmra.mxu0 %v599
  %v618 = vpop.f32.mrf.mxu0
  %v619 = vadd.f32 0.0, %v618
  %620 = vmatmul.f32.gmra.mxu0 %v600
  %v621 = vpop.f32.mrf.mxu0
  %v622 = vadd.f32 0.0, %v621
  %623 = vdwg.mxu0
  %v624 = vld [vmem:[%s11] sm:$0xff]
  %v625 = vld [vmem:[%s11 + $0x8] sm:$0xff]
  %v626 = vld [vmem:[%s11 + $0x10] sm:$0xff]
  %v627 = vld [vmem:[%s11 + $0x18] sm:$0xff]
  %v629 = vsel %vm139, %v619, 0
  %v632 = vsel %vm139, %v622, 0
  %634 = vmatpush.msra.mxu0 0.0
  %635 = vmatpush.msra.mxu0 0.0
  %636 = vmatpush.msra.mxu0 0.0
  %637 = vmatpush.msra.mxu0 0.0
  %638 = vmatpush.msra.mxu0 0.0
  %639 = vmatpush.msra.mxu0 0.0
  %640 = vmatpush.msra.mxu0 0.0
  %641 = vmatpush.msra.mxu0 0.0
  %642 = vmatpush.msra.mxu0 0.0
  %643 = vmatpush.msra.mxu0 0.0
  %644 = vmatpush.msra.mxu0 0.0
  %645 = vmatpush.msra.mxu0 0.0
  %646 = vmatpush.msra.mxu0 %v627
  %647 = vmatpush.msra.mxu0 %v626
  %648 = vmatpush.msra.mxu0 %v625
  %649 = vmatpush.msra.mxu0 %v624
  %650 = vmatmul.f32.gmra.mxu0 %v629
  %v651 = vpop.f32.mrf.mxu0
  %v652 = vadd.f32 0.0, %v651
  %653 = vmatmul.f32.gmra.mxu0 %v632
  %v654 = vpop.f32.mrf.mxu0
  %v655 = vadd.f32 0.0, %v654
  %656 = vdwg.mxu0
  %v657 = vadd.f32 %v83, %v652
  %v658 = vadd.f32 %v84, %v655
  %v659 = vld [vmem:[%s12] sm:$0x1]
  %v660 = vld [vmem:[%s13] sm:$0x1]
  %v661 = vsel %vm139, %v657, 0.0
  %662 = vadd.xlane.f32.xlu0 %v661
  %v663 = vpop.xlane.xlu0 %662
  %v664 = vsel %vm139, %v658, 0.0
  %665 = vadd.xlane.f32.xlu0 %v664
  %v666 = vpop.xlane.xlu0 %665
  %v667 = vrcp.pop 32.0
  %v668 = vmul.f32 32.0, %v667
  %v669 = vsub.f32 1.0, %v668
  %v670 = vmul.f32 %v667, %v669
  %v671 = vadd.f32 %v667, %v670
  %vm672 = vweird.f32 %v667
  %v673 = vsel %vm672, %v667, %v671
  %v674 = vmul.f32 %v663, %v673
  %v675 = vmul.f32 %v666, %v673
  %v676 = vsub.f32 %v657, %v674
  %v677 = vsub.f32 %v658, %v675
  %v678 = vmul.f32 %v676, %v676
  %v679 = vmul.f32 %v677, %v677
  %v680 = vsel %vm139, %v678, 0.0
  %681 = vadd.xlane.f32.xlu0 %v680
  %v682 = vpop.xlane.xlu0 %681
  %v683 = vsel %vm139, %v679, 0.0
  %684 = vadd.xlane.f32.xlu0 %v683
  %v685 = vpop.xlane.xlu0 %684
  %v686 = vmul.f32 %v682, %v673
  %v687 = vmul.f32 %v685, %v673
  %v688 = vadd.f32 %v686, 1e-12
  %v689 = vadd.f32 %v687, 1e-12
  %v690 = vrsqrt.pop %v688
  %v691 = vmul.f32 %v690, %v688
  %v692 = vmul.f32 %v691, %v690
  %v693 = vmul.f32 0.5, %v692
  %v694 = vsub.f32 1.5, %v693
  %v695 = vmul.f32 %v690, %v694
  %vm696 = vweird.f32 %v688
  %vm697 = vweird.f32 %v690
  %vm698 = vmor %vm696, %vm697
  %v699 = vsel %vm698, %v690, %v695
  %v700 = vrsqrt.pop %v689
  %v701 = vmul.f32 %v700, %v689
  %v702 = vmul.f32 %v701, %v700
  %v703 = vmul.f32 0.5, %v702
  %v704 = vsub.f32 1.5, %v703
  %v705 = vmul.f32 %v700, %v704
  %vm706 = vweird.f32 %v689
  %vm707 = vweird.f32 %v700
  %vm708 = vmor %vm706, %vm707
  %v709 = vsel %vm708, %v700, %v705
  %v710 = vmul.f32 %v676, %v699
  %v711 = vmul.f32 %v677, %v709
  %v713 = vperm.slane %v659, 0
  %v715 = vmul.f32 %v710, %v713
  %v716 = vmul.f32 %v711, %v713
  %v718 = vperm.slane %v660, 0
  %v720 = vadd.f32 %v715, %v718
  %v721 = vadd.f32 %v716, %v718
  %v722 = vld [vmem:[%s14] sm:$0xff]
  %v723 = vld [vmem:[%s14 + $0x8] sm:$0xff]
  %v724 = vld [vmem:[%s14 + $0x10] sm:$0xff]
  %v725 = vld [vmem:[%s14 + $0x18] sm:$0xff]
  %v726 = vld [vmem:[%s15] sm:$0x1]
  %v728 = vperm.slane %v726, 0
  %v731 = vsel %vm139, %v720, 0
  %v734 = vsel %vm139, %v721, 0
  %736 = vmatpush.msra.mxu0 0.0
  %737 = vmatpush.msra.mxu0 0.0
  %738 = vmatpush.msra.mxu0 0.0
  %739 = vmatpush.msra.mxu0 0.0
  %740 = vmatpush.msra.mxu0 0.0
  %741 = vmatpush.msra.mxu0 0.0
  %742 = vmatpush.msra.mxu0 0.0
  %743 = vmatpush.msra.mxu0 0.0
  %744 = vmatpush.msra.mxu0 0.0
  %745 = vmatpush.msra.mxu0 0.0
  %746 = vmatpush.msra.mxu0 0.0
  %747 = vmatpush.msra.mxu0 0.0
  %748 = vmatpush.msra.mxu0 %v725
  %749 = vmatpush.msra.mxu0 %v724
  %750 = vmatpush.msra.mxu0 %v723
  %751 = vmatpush.msra.mxu0 %v722
  %752 = vmatmul.f32.gmra.mxu0 %v731
  %v753 = vpop.f32.mrf.mxu0
  %v754 = vadd.f32 %v728, %v753
  %755 = vmatmul.f32.gmra.mxu0 %v734
  %v756 = vpop.f32.mrf.mxu0
  %v757 = vadd.f32 %v728, %v756
  %758 = vdwg.mxu0
  %v759 = vmul.f32 %v754, 0.5
  %v760 = vmul.f32 %v757, 0.5
  %v761 = vmul.f32 %v754, 0.70710677
  %v762 = vmul.f32 %v757, 0.70710677
  %v763 = vmul.f32 %v761, %v761
  %v764 = vmin.f32 16.0, %v763
  %v765 = vmul.f32 %v764, 2.1237322e-06
  %v766 = vadd.f32 %v765, 0.00028619796
  %v767 = vmul.f32 %v764, %v766
  %v768 = vadd.f32 %v767, 0.0036580483
  %v769 = vmul.f32 %v764, %v768
  %v770 = vadd.f32 %v769, 0.05243302
  %v771 = vmul.f32 %v764, %v770
  %v772 = vadd.f32 %v771, 0.18741608
  %v773 = vmul.f32 %v764, %v772
  %v774 = vadd.f32 %v773, 1.1283791
  %v775 = vmul.f32 %v761, %v774
  %v776 = vmul.f32 %v764, 3.8918573e-05
  %v777 = vadd.f32 %v776, 0.001143296
  %v778 = vmul.f32 %v764, %v777
  %v779 = vadd.f32 %v778, 0.014752088
  %v780 = vmul.f32 %v764, %v779
  %v781 = vadd.f32 %v780, 0.112945676
  %v782 = vmul.f32 %v764, %v781
  %v783 = vadd.f32 %v782, 0.4994258
  %v784 = vmul.f32 %v764, %v783
  %v785 = vadd.f32 %v784, 1.0
  %v786 = vrcp.pop %v785
  %v787 = vmul.f32 %v785, %v786
  %v788 = vsub.f32 1.0, %v787
  %v789 = vmul.f32 %v786, %v788
  %v790 = vadd.f32 %v786, %v789
  %vm791 = vweird.f32 %v785
  %vm792 = vweird.f32 %v786
  %vm793 = vmor %vm791, %vm792
  %v794 = vsel %vm793, %v786, %v790
  %v795 = vand.u32 2147483647, %v785
  %vm796 = vcmp.eq.f32.partialorder %v795, 8.507059e+37
  %v797 = vand.u32 %v785, 2147483648
  %v798 = vor.u32 1.1754944e-38, %v797
  %v799 = vsel %vm796, %v798, %v794
  %v800 = vmul.f32 %v775, %v799
  %v801 = vmin.f32 %v800, 1.0
  %v802 = vmax.f32 %v801, -1.0
  %v803 = vmul.f32 %v762, %v762
  %v804 = vmin.f32 16.0, %v803
  %v805 = vmul.f32 %v804, 2.1237322e-06
  %v806 = vadd.f32 %v805, 0.00028619796
  %v807 = vmul.f32 %v804, %v806
  %v808 = vadd.f32 %v807, 0.0036580483
  %v809 = vmul.f32 %v804, %v808
  %v810 = vadd.f32 %v809, 0.05243302
  %v811 = vmul.f32 %v804, %v810
  %v812 = vadd.f32 %v811, 0.18741608
  %v813 = vmul.f32 %v804, %v812
  %v814 = vadd.f32 %v813, 1.1283791
  %v815 = vmul.f32 %v762, %v814
  %v816 = vmul.f32 %v804, 3.8918573e-05
  %v817 = vadd.f32 %v816, 0.001143296
  %v818 = vmul.f32 %v804, %v817
  %v819 = vadd.f32 %v818, 0.014752088
  %v820 = vmul.f32 %v804, %v819
  %v821 = vadd.f32 %v820, 0.112945676
  %v822 = vmul.f32 %v804, %v821
  %v823 = vadd.f32 %v822, 0.4994258
  %v824 = vmul.f32 %v804, %v823
  %v825 = vadd.f32 %v824, 1.0
  %v826 = vrcp.pop %v825
  %v827 = vmul.f32 %v825, %v826
  %v828 = vsub.f32 1.0, %v827
  %v829 = vmul.f32 %v826, %v828
  %v830 = vadd.f32 %v826, %v829
  %vm831 = vweird.f32 %v825
  %vm832 = vweird.f32 %v826
  %vm833 = vmor %vm831, %vm832
  %v834 = vsel %vm833, %v826, %v830
  %v835 = vand.u32 2147483647, %v825
  %vm836 = vcmp.eq.f32.partialorder %v835, 8.507059e+37
  %v837 = vand.u32 %v825, 2147483648
  %v838 = vor.u32 1.1754944e-38, %v837
  %v839 = vsel %vm836, %v838, %v834
  %v840 = vmul.f32 %v815, %v839
  %v841 = vmin.f32 %v840, 1.0
  %v842 = vmax.f32 %v841, -1.0
  %v843 = vadd.f32 %v802, 1.0
  %v844 = vadd.f32 %v842, 1.0
  %v845 = vmul.f32 %v759, %v843
  %v846 = vmul.f32 %v760, %v844
  %v847 = vld [vmem:[%s16] sm:$0xff]
  %v848 = vld [vmem:[%s16 + $0x8] sm:$0xff]
  %v849 = vld [vmem:[%s16 + $0x10] sm:$0xff]
  %v850 = vld [vmem:[%s16 + $0x18] sm:$0xff]
  %v851 = vld [vmem:[%s16 + $0x20] sm:$0xff]
  %v852 = vld [vmem:[%s16 + $0x28] sm:$0xff]
  %v853 = vld [vmem:[%s16 + $0x30] sm:$0xff]
  %v854 = vld [vmem:[%s16 + $0x38] sm:$0xff]
  %v855 = vld [vmem:[%s17] sm:$0x1]
  %v857 = vperm.slane %v855, 0
  %vm859 = vcmask 523264
  %v861 = vsel %vm859, %v845, 0
  %v864 = vsel %vm859, %v846, 0
  %866 = vmatpush.msra.mxu0 0.0
  %867 = vmatpush.msra.mxu0 0.0
  %868 = vmatpush.msra.mxu0 0.0
  %869 = vmatpush.msra.mxu0 0.0
  %870 = vmatpush.msra.mxu0 0.0
  %871 = vmatpush.msra.mxu0 0.0
  %872 = vmatpush.msra.mxu0 0.0
  %873 = vmatpush.msra.mxu0 0.0
  %874 = vmatpush.msra.mxu0 %v854
  %875 = vmatpush.msra.mxu0 %v853
  %876 = vmatpush.msra.mxu0 %v852
  %877 = vmatpush.msra.mxu0 %v851
  %878 = vmatpush.msra.mxu0 %v850
  %879 = vmatpush.msra.mxu0 %v849
  %880 = vmatpush.msra.mxu0 %v848
  %881 = vmatpush.msra.mxu0 %v847
  %882 = vmatmul.f32.gmra.mxu0 %v861
  %v883 = vpop.f32.mrf.mxu0
  %v884 = vadd.f32 %v857, %v883
  %885 = vmatmul.f32.gmra.mxu0 %v864
  %v886 = vpop.f32.mrf.mxu0
  %v887 = vadd.f32 %v857, %v886
  %888 = vdwg.mxu0
  %v889 = vadd.f32 %v884, %v720
  %v890 = vadd.f32 %v887, %v721
  %v891 = vld [vmem:[%s18] sm:$0x1]
  %v892 = vld [vmem:[%s19] sm:$0x1]
  %v893 = vsel %vm139, %v889, 0.0
  %894 = vadd.xlane.f32.xlu0 %v893
  %v895 = vpop.xlane.xlu0 %894
  %v896 = vsel %vm139, %v890, 0.0
  %897 = vadd.xlane.f32.xlu0 %v896
  %v898 = vpop.xlane.xlu0 %897
  %v899 = vmul.f32 %v895, %v673
  %v900 = vmul.f32 %v898, %v673
  %v901 = vsub.f32 %v889, %v899
  %v902 = vsub.f32 %v890, %v900
  %v903 = vmul.f32 %v901, %v901
  %v904 = vmul.f32 %v902, %v902
  %v905 = vsel %vm139, %v903, 0.0
  %906 = vadd.xlane.f32.xlu0 %v905
  %v907 = vpop.xlane.xlu0 %906
  %v908 = vsel %vm139, %v904, 0.0
  %909 = vadd.xlane.f32.xlu0 %v908
  %v910 = vpop.xlane.xlu0 %909
  %v911 = vmul.f32 %v907, %v673
  %v912 = vmul.f32 %v910, %v673
  %v913 = vadd.f32 %v911, 1e-12
  %v914 = vadd.f32 %v912, 1e-12
  %v915 = vrsqrt.pop %v913
  %v916 = vmul.f32 %v915, %v913
  %v917 = vmul.f32 %v916, %v915
  %v918 = vmul.f32 0.5, %v917
  %v919 = vsub.f32 1.5, %v918
  %v920 = vmul.f32 %v915, %v919
  %vm921 = vweird.f32 %v913
  %vm922 = vweird.f32 %v915
  %vm923 = vmor %vm921, %vm922
  %v924 = vsel %vm923, %v915, %v920
  %v925 = vrsqrt.pop %v914
  %v926 = vmul.f32 %v925, %v914
  %v927 = vmul.f32 %v926, %v925
  %v928 = vmul.f32 0.5, %v927
  %v929 = vsub.f32 1.5, %v928
  %v930 = vmul.f32 %v925, %v929
  %vm931 = vweird.f32 %v914
  %vm932 = vweird.f32 %v925
  %vm933 = vmor %vm931, %vm932
  %v934 = vsel %vm933, %v925, %v930
  %v935 = vmul.f32 %v901, %v924
  %v936 = vmul.f32 %v902, %v934
  %v938 = vperm.slane %v891, 0
  %v940 = vmul.f32 %v935, %v938
  %v941 = vmul.f32 %v936, %v938
  %v943 = vperm.slane %v892, 0
  %v945 = vadd.f32 %v940, %v943
  %v946 = vadd.f32 %v941, %v943
  %s947 = scalar_lea.vmem %s8, 32
  %v948 = vld [vmem:[%s947] sm:$0xff]
  %v949 = vld [vmem:[%s947 + $0x8] sm:$0xff]
  %v950 = vld [vmem:[%s947 + $0x10] sm:$0xff]
  %v951 = vld [vmem:[%s947 + $0x18] sm:$0xff]
  %v953 = vsel %vm139, %v945, 0
  %v956 = vsel %vm139, %v946, 0
  %958 = vmatpush.msra.mxu0 0.0
  %959 = vmatpush.msra.mxu0 0.0
  %960 = vmatpush.msra.mxu0 0.0
  %961 = vmatpush.msra.mxu0 0.0
  %962 = vmatpush.msra.mxu0 0.0
  %963 = vmatpush.msra.mxu0 0.0
  %964 = vmatpush.msra.mxu0 0.0
  %965 = vmatpush.msra.mxu0 0.0
  %966 = vmatpush.msra.mxu0 0.0
  %967 = vmatpush.msra.mxu0 0.0
  %968 = vmatpush.msra.mxu0 0.0
  %969 = vmatpush.msra.mxu0 0.0
  %970 = vmatpush.msra.mxu0 %v951
  %971 = vmatpush.msra.mxu0 %v950
  %972 = vmatpush.msra.mxu0 %v949
  %973 = vmatpush.msra.mxu0 %v948
  %974 = vmatmul.f32.gmra.mxu0 %v953
  %v975 = vpop.f32.mrf.mxu0
  %v976 = vadd.f32 0.0, %v975
  %977 = vmatmul.f32.gmra.mxu0 %v956
  %v978 = vpop.f32.mrf.mxu0
  %v979 = vadd.f32 0.0, %v978
  %980 = vdwg.mxu0
  %s981 = scalar_lea.vmem %s9, 32
  %v982 = vld [vmem:[%s981] sm:$0xff]
  %v983 = vld [vmem:[%s981 + $0x8] sm:$0xff]
  %v984 = vld [vmem:[%s981 + $0x10] sm:$0xff]
  %v985 = vld [vmem:[%s981 + $0x18] sm:$0xff]
  %986 = vmatpush.msra.mxu0 0.0
  %987 = vmatpush.msra.mxu0 0.0
  %988 = vmatpush.msra.mxu0 0.0
  %989 = vmatpush.msra.mxu0 0.0
  %990 = vmatpush.msra.mxu0 0.0
  %991 = vmatpush.msra.mxu0 0.0
  %992 = vmatpush.msra.mxu0 0.0
  %993 = vmatpush.msra.mxu0 0.0
  %994 = vmatpush.msra.mxu0 0.0
  %995 = vmatpush.msra.mxu0 0.0
  %996 = vmatpush.msra.mxu0 0.0
  %997 = vmatpush.msra.mxu0 0.0
  %998 = vmatpush.msra.mxu0 %v985
  %999 = vmatpush.msra.mxu0 %v984
  %1000 = vmatpush.msra.mxu0 %v983
  %1001 = vmatpush.msra.mxu0 %v982
  %1002 = vmatmul.f32.gmra.mxu0 %v953
  %v1003 = vpop.f32.mrf.mxu0
  %v1004 = vadd.f32 0.0, %v1003
  %1005 = vmatmul.f32.gmra.mxu0 %v956
  %v1006 = vpop.f32.mrf.mxu0
  %v1007 = vadd.f32 0.0, %v1006
  %1008 = vdwg.mxu0
  %s1009 = scalar_lea.vmem %s10, 32
  %v1010 = vld [vmem:[%s1009] sm:$0xff]
  %v1011 = vld [vmem:[%s1009 + $0x8] sm:$0xff]
  %v1012 = vld [vmem:[%s1009 + $0x10] sm:$0xff]
  %v1013 = vld [vmem:[%s1009 + $0x18] sm:$0xff]
  %1014 = vmatpush.msra.mxu0 0.0
  %1015 = vmatpush.msra.mxu0 0.0
  %1016 = vmatpush.msra.mxu0 0.0
  %1017 = vmatpush.msra.mxu0 0.0
  %1018 = vmatpush.msra.mxu0 0.0
  %1019 = vmatpush.msra.mxu0 0.0
  %1020 = vmatpush.msra.mxu0 0.0
  %1021 = vmatpush.msra.mxu0 0.0
  %1022 = vmatpush.msra.mxu0 0.0
  %1023 = vmatpush.msra.mxu0 0.0
  %1024 = vmatpush.msra.mxu0 0.0
  %1025 = vmatpush.msra.mxu0 0.0
  %1026 = vmatpush.msra.mxu0 %v1013
  %1027 = vmatpush.msra.mxu0 %v1012
  %1028 = vmatpush.msra.mxu0 %v1011
  %1029 = vmatpush.msra.mxu0 %v1010
  %1030 = vmatmul.f32.gmra.mxu0 %v953
  %v1031 = vpop.f32.mrf.mxu0
  %v1032 = vadd.f32 0.0, %v1031
  %1033 = vmatmul.f32.gmra.mxu0 %v956
  %v1034 = vpop.f32.mrf.mxu0
  %v1035 = vadd.f32 0.0, %v1034
  %1036 = vdwg.mxu0
  %1037 = vmatpush.msra.mxu0 0.0
  %1038 = vmatpush.msra.mxu0 0.0
  %1039 = vmatpush.msra.mxu0 0.0
  %1040 = vmatpush.msra.mxu0 0.0
  %1041 = vmatpush.msra.mxu0 0.0
  %1042 = vmatpush.msra.mxu0 0.0
  %1043 = vmatpush.msra.mxu0 0.0
  %1044 = vmatpush.msra.mxu0 0.0
  %1045 = vmatpush.msra.mxu0 0.0
  %1046 = vmatpush.msra.mxu0 0.0
  %1047 = vmatpush.msra.mxu0 0.0
  %1048 = vmatpush.msra.mxu0 0.0
  %1049 = vmatpush.msra.mxu0 0.0
  %1050 = vmatpush.msra.mxu0 0.0
  %1051 = vmatpush.msra.mxu0 %v1007
  %1052 = vmatpush.msra.mxu0 %v1004
  %1053 = vmatmul.f32.gmra.mxu0 %v225
  %v1054 = vpop.f32.mrf.mxu0
  %v1055 = vadd.f32 0.0, %v1054
  %1056 = vmatmul.f32.gmra.mxu0 %v228
  %v1057 = vpop.f32.mrf.mxu0
  %v1058 = vadd.f32 0.0, %v1057
  %1059 = vmatmul.f32.gmra.mxu0 %v231
  %v1060 = vpop.f32.mrf.mxu0
  %v1061 = vadd.f32 0.0, %v1060
  %1062 = vmatmul.f32.gmra.mxu0 %v234
  %v1063 = vpop.f32.mrf.mxu0
  %v1064 = vadd.f32 0.0, %v1063
  %1065 = vmatmul.f32.gmra.mxu0 %v237
  %v1066 = vpop.f32.mrf.mxu0
  %v1067 = vadd.f32 0.0, %v1066
  %1068 = vmatmul.f32.gmra.mxu0 %v240
  %v1069 = vpop.f32.mrf.mxu0
  %v1070 = vadd.f32 0.0, %v1069
  %1071 = vmatmul.f32.gmra.mxu0 %v243
  %v1072 = vpop.f32.mrf.mxu0
  %v1073 = vadd.f32 0.0, %v1072
  %1074 = vmatmul.f32.gmra.mxu0 %v246
  %v1075 = vpop.f32.mrf.mxu0
  %v1076 = vadd.f32 0.0, %v1075
  %1077 = vmatmul.f32.gmra.mxu0 %v249
  %v1078 = vpop.f32.mrf.mxu0
  %v1079 = vadd.f32 0.0, %v1078
  %1080 = vmatmul.f32.gmra.mxu0 %v252
  %v1081 = vpop.f32.mrf.mxu0
  %v1082 = vadd.f32 0.0, %v1081
  %1083 = vmatmul.f32.gmra.mxu0 %v255
  %v1084 = vpop.f32.mrf.mxu0
  %v1085 = vadd.f32 0.0, %v1084
  %1086 = vmatmul.f32.gmra.mxu0 %v258
  %v1087 = vpop.f32.mrf.mxu0
  %v1088 = vadd.f32 0.0, %v1087
  %1089 = vmatmul.f32.gmra.mxu0 %v261
  %v1090 = vpop.f32.mrf.mxu0
  %v1091 = vadd.f32 0.0, %v1090
  %1092 = vmatmul.f32.gmra.mxu0 %v264
  %v1093 = vpop.f32.mrf.mxu0
  %v1094 = vadd.f32 0.0, %v1093
  %1095 = vmatmul.f32.gmra.mxu0 %v267
  %v1096 = vpop.f32.mrf.mxu0
  %v1097 = vadd.f32 0.0, %v1096
  %1098 = vmatmul.f32.gmra.mxu0 %v270
  %v1099 = vpop.f32.mrf.mxu0
  %v1100 = vadd.f32 0.0, %v1099
  %1101 = vdwg.mxu0
  %v1102 = vmul.f32 %v1055, %v103
  %v1103 = vmul.f32 %v1058, %v104
  %v1104 = vmul.f32 %v1061, %v105
  %v1105 = vmul.f32 %v1064, %v106
  %v1106 = vmul.f32 %v1067, %v107
  %v1107 = vmul.f32 %v1070, %v108
  %v1108 = vmul.f32 %v1073, %v109
  %v1109 = vmul.f32 %v1076, %v110
  %v1110 = vmul.f32 %v1079, %v111
  %v1111 = vmul.f32 %v1082, %v112
  %v1112 = vmul.f32 %v1085, %v113
  %v1113 = vmul.f32 %v1088, %v114
  %v1114 = vmul.f32 %v1091, %v115
  %v1115 = vmul.f32 %v1094, %v116
  %v1116 = vmul.f32 %v1097, %v117
  %v1117 = vmul.f32 %v1100, %v118
  %1118 = vmatpush.msra.mxu0 0.0
  %1119 = vmatpush.msra.mxu0 0.0
  %1120 = vmatpush.msra.mxu0 0.0
  %1121 = vmatpush.msra.mxu0 0.0
  %1122 = vmatpush.msra.mxu0 0.0
  %1123 = vmatpush.msra.mxu0 0.0
  %1124 = vmatpush.msra.mxu0 0.0
  %1125 = vmatpush.msra.mxu0 0.0
  %1126 = vmatpush.msra.mxu0 0.0
  %1127 = vmatpush.msra.mxu0 0.0
  %1128 = vmatpush.msra.mxu0 0.0
  %1129 = vmatpush.msra.mxu0 0.0
  %1130 = vmatpush.msra.mxu0 0.0
  %1131 = vmatpush.msra.mxu0 0.0
  %1132 = vmatpush.msra.mxu0 %v1035
  %1133 = vmatpush.msra.mxu0 %v1032
  %1134 = vmatmul.f32.gmra.mxu0 %v225
  %v1135 = vpop.f32.mrf.mxu0
  %v1136 = vadd.f32 0.0, %v1135
  %1137 = vmatmul.f32.gmra.mxu0 %v228
  %v1138 = vpop.f32.mrf.mxu0
  %v1139 = vadd.f32 0.0, %v1138
  %1140 = vmatmul.f32.gmra.mxu0 %v231
  %v1141 = vpop.f32.mrf.mxu0
  %v1142 = vadd.f32 0.0, %v1141
  %1143 = vmatmul.f32.gmra.mxu0 %v234
  %v1144 = vpop.f32.mrf.mxu0
  %v1145 = vadd.f32 0.0, %v1144
  %1146 = vmatmul.f32.gmra.mxu0 %v237
  %v1147 = vpop.f32.mrf.mxu0
  %v1148 = vadd.f32 0.0, %v1147
  %1149 = vmatmul.f32.gmra.mxu0 %v240
  %v1150 = vpop.f32.mrf.mxu0
  %v1151 = vadd.f32 0.0, %v1150
  %1152 = vmatmul.f32.gmra.mxu0 %v243
  %v1153 = vpop.f32.mrf.mxu0
  %v1154 = vadd.f32 0.0, %v1153
  %1155 = vmatmul.f32.gmra.mxu0 %v246
  %v1156 = vpop.f32.mrf.mxu0
  %v1157 = vadd.f32 0.0, %v1156
  %1158 = vmatmul.f32.gmra.mxu0 %v249
  %v1159 = vpop.f32.mrf.mxu0
  %v1160 = vadd.f32 0.0, %v1159
  %1161 = vmatmul.f32.gmra.mxu0 %v252
  %v1162 = vpop.f32.mrf.mxu0
  %v1163 = vadd.f32 0.0, %v1162
  %1164 = vmatmul.f32.gmra.mxu0 %v255
  %v1165 = vpop.f32.mrf.mxu0
  %v1166 = vadd.f32 0.0, %v1165
  %1167 = vmatmul.f32.gmra.mxu0 %v258
  %v1168 = vpop.f32.mrf.mxu0
  %v1169 = vadd.f32 0.0, %v1168
  %1170 = vmatmul.f32.gmra.mxu0 %v261
  %v1171 = vpop.f32.mrf.mxu0
  %v1172 = vadd.f32 0.0, %v1171
  %1173 = vmatmul.f32.gmra.mxu0 %v264
  %v1174 = vpop.f32.mrf.mxu0
  %v1175 = vadd.f32 0.0, %v1174
  %1176 = vmatmul.f32.gmra.mxu0 %v267
  %v1177 = vpop.f32.mrf.mxu0
  %v1178 = vadd.f32 0.0, %v1177
  %1179 = vmatmul.f32.gmra.mxu0 %v270
  %v1180 = vpop.f32.mrf.mxu0
  %v1181 = vadd.f32 0.0, %v1180
  %1182 = vdwg.mxu0
  %v1183 = vmul.f32 %v1136, %v103
  %v1184 = vmul.f32 %v1139, %v104
  %v1185 = vmul.f32 %v1142, %v105
  %v1186 = vmul.f32 %v1145, %v106
  %v1187 = vmul.f32 %v1148, %v107
  %v1188 = vmul.f32 %v1151, %v108
  %v1189 = vmul.f32 %v1154, %v109
  %v1190 = vmul.f32 %v1157, %v110
  %v1191 = vmul.f32 %v1160, %v111
  %v1192 = vmul.f32 %v1163, %v112
  %v1193 = vmul.f32 %v1166, %v113
  %v1194 = vmul.f32 %v1169, %v114
  %v1195 = vmul.f32 %v1172, %v115
  %v1196 = vmul.f32 %v1175, %v116
  %v1197 = vmul.f32 %v1178, %v117
  %v1198 = vmul.f32 %v1181, %v118
  %s1199 = scalar_lea.vmem %s7, 1
  %v1200 = vld [vmem:[%s1199] sm:$0x1]
  %v1202 = vperm.slane %v1200, 0
  %v1204 = vadd.f32 %v976, %v1202
  %v1205 = vadd.f32 %v979, %v1202
  %s1206 = scalar_lea.vmem %s5, 32
  %v1207 = vld [vmem:[%s1206] sm:$0xff]
  %v1208 = vld [vmem:[%s1206 + $0x8] sm:$0xff]
  %v1209 = vld [vmem:[%s1206 + $0x10] sm:$0xff]
  %v1210 = vld [vmem:[%s1206 + $0x18] sm:$0xff]
  %s1211 = scalar_lea.vmem %s6, 1
  %v1212 = vld [vmem:[%s1211] sm:$0x1]
  %v1214 = vperm.slane %v1212, 0
  %v1217 = vsel %vm139, %v976, 0
  %v1220 = vsel %vm139, %v979, 0
  %1222 = vmatpush.msra.mxu0 0.0
  %1223 = vmatpush.msra.mxu0 0.0
  %1224 = vmatpush.msra.mxu0 0.0
  %1225 = vmatpush.msra.mxu0 0.0
  %1226 = vmatpush.msra.mxu0 0.0
  %1227 = vmatpush.msra.mxu0 0.0
  %1228 = vmatpush.msra.mxu0 0.0
  %1229 = vmatpush.msra.mxu0 0.0
  %1230 = vmatpush.msra.mxu0 0.0
  %1231 = vmatpush.msra.mxu0 0.0
  %1232 = vmatpush.msra.mxu0 0.0
  %1233 = vmatpush.msra.mxu0 0.0
  %1234 = vmatpush.msra.mxu0 %v1210
  %1235 = vmatpush.msra.mxu0 %v1209
  %1236 = vmatpush.msra.mxu0 %v1208
  %1237 = vmatpush.msra.mxu0 %v1207
  %1238 = vmatmul.f32.gmra.mxu0 %v1217
  %v1239 = vpop.f32.mrf.mxu0
  %v1240 = vadd.f32 %v1214, %v1239
  %1241 = vmatmul.f32.gmra.mxu0 %v1220
  %v1242 = vpop.f32.mrf.mxu0
  %v1243 = vadd.f32 %v1214, %v1242
  %1244 = vdwg.mxu0
  %s1246 = sor.u32 256, 120
  %1247 = vrot.lane.b32.xlu0 %v1240, %s1246
  %v1248 = vpop.permute.xlu0 %1247
  %s1250 = sor.u32 256, 120
  %1251 = vrot.lane.b32.xlu0 %v1243, %s1250
  %v1252 = vpop.permute.xlu0 %1251
  %v1254 = vsel %vm139, %v1204, 0
  %v1257 = vsel %vm139, %v1205, 0
  %v1260 = vsel %vm139, %v1102, 0
  %v1263 = vsel %vm139, %v1103, 0
  %v1266 = vsel %vm139, %v1104, 0
  %v1269 = vsel %vm139, %v1105, 0
  %v1272 = vsel %vm139, %v1106, 0
  %v1275 = vsel %vm139, %v1107, 0
  %v1278 = vsel %vm139, %v1108, 0
  %v1281 = vsel %vm139, %v1109, 0
  %v1284 = vsel %vm139, %v1110, 0
  %v1287 = vsel %vm139, %v1111, 0
  %v1290 = vsel %vm139, %v1112, 0
  %v1293 = vsel %vm139, %v1113, 0
  %v1296 = vsel %vm139, %v1114, 0
  %v1299 = vsel %vm139, %v1115, 0
  %v1302 = vsel %vm139, %v1116, 0
  %v1305 = vsel %vm139, %v1117, 0
  %1307 = vmatpush.xpose.msra.mxu0 %v1305
  %1308 = vmatpush.xpose.msra.mxu0 %v1302
  %1309 = vmatpush.xpose.msra.mxu0 %v1299
  %1310 = vmatpush.xpose.msra.mxu0 %v1296
  %1311 = vmatpush.xpose.msra.mxu0 %v1293
  %1312 = vmatpush.xpose.msra.mxu0 %v1290
  %1313 = vmatpush.xpose.msra.mxu0 %v1287
  %1314 = vmatpush.xpose.msra.mxu0 %v1284
  %1315 = vmatpush.xpose.msra.mxu0 %v1281
  %1316 = vmatpush.xpose.msra.mxu0 %v1278
  %1317 = vmatpush.xpose.msra.mxu0 %v1275
  %1318 = vmatpush.xpose.msra.mxu0 %v1272
  %1319 = vmatpush.xpose.msra.mxu0 %v1269
  %1320 = vmatpush.xpose.msra.mxu0 %v1266
  %1321 = vmatpush.xpose.msra.mxu0 %v1263
  %1322 = vmatpush.xpose.msra.mxu0 %v1260
  %1323 = vmatmul.f32.gmra.mxu0 %v1254
  %v1324 = vpop.f32.mrf.mxu0
  %v1325 = vadd.f32 %v1248, %v1324
  %1326 = vmatmul.f32.gmra.mxu0 %v1257
  %v1327 = vpop.f32.mrf.mxu0
  %v1328 = vadd.f32 %v1252, %v1327
  %1329 = vdwg.mxu0
  %v1330 = vadd.f32 %v1325, %v85
  %v1331 = vadd.f32 %v1328, %v86
  %1332 = vmax.xlane.f32.xlu0 %v1330
  %v1333 = vpop.xlane.xlu0 %1332
  %1334 = vmax.xlane.f32.xlu0 %v1331
  %v1335 = vpop.xlane.xlu0 %1334
  %v1336 = vsub.f32 %v1330, %v1333
  %v1337 = vsub.f32 %v1331, %v1335
  %v1338 = vmul.f32 %v1336, 1.442695
  %v1339 = vpow.pop %v1338
  %v1340 = vmul.f32 %v1337, 1.442695
  %v1341 = vpow.pop %v1340
  %1342 = vmatpush.msra.mxu0 %v134
  %1343 = vmatpush.msra.mxu0 %v133
  %1344 = vmatpush.msra.mxu0 %v132
  %1345 = vmatpush.msra.mxu0 %v131
  %1346 = vmatpush.msra.mxu0 %v130
  %1347 = vmatpush.msra.mxu0 %v129
  %1348 = vmatpush.msra.mxu0 %v128
  %1349 = vmatpush.msra.mxu0 %v127
  %1350 = vmatpush.msra.mxu0 %v126
  %1351 = vmatpush.msra.mxu0 %v125
  %1352 = vmatpush.msra.mxu0 %v124
  %1353 = vmatpush.msra.mxu0 %v123
  %1354 = vmatpush.msra.mxu0 %v122
  %1355 = vmatpush.msra.mxu0 %v121
  %1356 = vmatpush.msra.mxu0 %v120
  %1357 = vmatpush.msra.mxu0 %v119
  %1358 = vmatmul.f32.gmra.mxu0 %v1339
  %v1359 = vpop.f32.mrf.mxu0
  %v1360 = vadd.f32 1e-30, %v1359
  %1361 = vmatmul.f32.gmra.mxu0 %v1341
  %v1362 = vpop.f32.mrf.mxu0
  %v1363 = vadd.f32 1e-30, %v1362
  %1364 = vdwg.mxu0
  %v1365 = vrcp.pop %v1360
  %v1366 = vrcp.pop %v1363
  %v1367 = vmul.f32 %v1339, %v1365
  %v1368 = vmul.f32 %v1341, %v1366
  %1369 = vmatpush.msra.mxu0 %v1198
  %1370 = vmatpush.msra.mxu0 %v1197
  %1371 = vmatpush.msra.mxu0 %v1196
  %1372 = vmatpush.msra.mxu0 %v1195
  %1373 = vmatpush.msra.mxu0 %v1194
  %1374 = vmatpush.msra.mxu0 %v1193
  %1375 = vmatpush.msra.mxu0 %v1192
  %1376 = vmatpush.msra.mxu0 %v1191
  %1377 = vmatpush.msra.mxu0 %v1190
  %1378 = vmatpush.msra.mxu0 %v1189
  %1379 = vmatpush.msra.mxu0 %v1188
  %1380 = vmatpush.msra.mxu0 %v1187
  %1381 = vmatpush.msra.mxu0 %v1186
  %1382 = vmatpush.msra.mxu0 %v1185
  %1383 = vmatpush.msra.mxu0 %v1184
  %1384 = vmatpush.msra.mxu0 %v1183
  %1385 = vmatmul.f32.gmra.mxu0 %v1367
  %v1386 = vpop.f32.mrf.mxu0
  %v1387 = vadd.f32 0.0, %v1386
  %1388 = vmatmul.f32.gmra.mxu0 %v1368
  %v1389 = vpop.f32.mrf.mxu0
  %v1390 = vadd.f32 0.0, %v1389
  %1391 = vdwg.mxu0
  %s1392 = scalar_lea.vmem %s11, 32
  %v1393 = vld [vmem:[%s1392] sm:$0xff]
  %v1394 = vld [vmem:[%s1392 + $0x8] sm:$0xff]
  %v1395 = vld [vmem:[%s1392 + $0x10] sm:$0xff]
  %v1396 = vld [vmem:[%s1392 + $0x18] sm:$0xff]
  %v1398 = vsel %vm139, %v1387, 0
  %v1401 = vsel %vm139, %v1390, 0
  %1403 = vmatpush.msra.mxu0 0.0
  %1404 = vmatpush.msra.mxu0 0.0
  %1405 = vmatpush.msra.mxu0 0.0
  %1406 = vmatpush.msra.mxu0 0.0
  %1407 = vmatpush.msra.mxu0 0.0
  %1408 = vmatpush.msra.mxu0 0.0
  %1409 = vmatpush.msra.mxu0 0.0
  %1410 = vmatpush.msra.mxu0 0.0
  %1411 = vmatpush.msra.mxu0 0.0
  %1412 = vmatpush.msra.mxu0 0.0
  %1413 = vmatpush.msra.mxu0 0.0
  %1414 = vmatpush.msra.mxu0 0.0
  %1415 = vmatpush.msra.mxu0 %v1396
  %1416 = vmatpush.msra.mxu0 %v1395
  %1417 = vmatpush.msra.mxu0 %v1394
  %1418 = vmatpush.msra.mxu0 %v1393
  %1419 = vmatmul.f32.gmra.mxu0 %v1398
  %v1420 = vpop.f32.mrf.mxu0
  %v1421 = vadd.f32 0.0, %v1420
  %1422 = vmatmul.f32.gmra.mxu0 %v1401
  %v1423 = vpop.f32.mrf.mxu0
  %v1424 = vadd.f32 0.0, %v1423
  %1425 = vdwg.mxu0
  %v1426 = vadd.f32 %v945, %v1421
  %v1427 = vadd.f32 %v946, %v1424
  %s1428 = scalar_lea.vmem %s12, 1
  %v1429 = vld [vmem:[%s1428] sm:$0x1]
  %s1430 = scalar_lea.vmem %s13, 1
  %v1431 = vld [vmem:[%s1430] sm:$0x1]
  %v1432 = vsel %vm139, %v1426, 0.0
  %1433 = vadd.xlane.f32.xlu0 %v1432
  %v1434 = vpop.xlane.xlu0 %1433
  %v1435 = vsel %vm139, %v1427, 0.0
  %1436 = vadd.xlane.f32.xlu0 %v1435
  %v1437 = vpop.xlane.xlu0 %1436
  %v1438 = vmul.f32 %v1434, %v673
  %v1439 = vmul.f32 %v1437, %v673
  %v1440 = vsub.f32 %v1426, %v1438
  %v1441 = vsub.f32 %v1427, %v1439
  %v1442 = vmul.f32 %v1440, %v1440
  %v1443 = vmul.f32 %v1441, %v1441
  %v1444 = vsel %vm139, %v1442, 0.0
  %1445 = vadd.xlane.f32.xlu0 %v1444
  %v1446 = vpop.xlane.xlu0 %1445
  %v1447 = vsel %vm139, %v1443, 0.0
  %1448 = vadd.xlane.f32.xlu0 %v1447
  %v1449 = vpop.xlane.xlu0 %1448
  %v1450 = vmul.f32 %v1446, %v673
  %v1451 = vmul.f32 %v1449, %v673
  %v1452 = vadd.f32 %v1450, 1e-12
  %v1453 = vadd.f32 %v1451, 1e-12
  %v1454 = vrsqrt.pop %v1452
  %v1455 = vmul.f32 %v1454, %v1452
  %v1456 = vmul.f32 %v1455, %v1454
  %v1457 = vmul.f32 0.5, %v1456
  %v1458 = vsub.f32 1.5, %v1457
  %v1459 = vmul.f32 %v1454, %v1458
  %vm1460 = vweird.f32 %v1452
  %vm1461 = vweird.f32 %v1454
  %vm1462 = vmor %vm1460, %vm1461
  %v1463 = vsel %vm1462, %v1454, %v1459
  %v1464 = vrsqrt.pop %v1453
  %v1465 = vmul.f32 %v1464, %v1453
  %v1466 = vmul.f32 %v1465, %v1464
  %v1467 = vmul.f32 0.5, %v1466
  %v1468 = vsub.f32 1.5, %v1467
  %v1469 = vmul.f32 %v1464, %v1468
  %vm1470 = vweird.f32 %v1453
  %vm1471 = vweird.f32 %v1464
  %vm1472 = vmor %vm1470, %vm1471
  %v1473 = vsel %vm1472, %v1464, %v1469
  %v1474 = vmul.f32 %v1440, %v1463
  %v1475 = vmul.f32 %v1441, %v1473
  %v1477 = vperm.slane %v1429, 0
  %v1479 = vmul.f32 %v1474, %v1477
  %v1480 = vmul.f32 %v1475, %v1477
  %v1482 = vperm.slane %v1431, 0
  %v1484 = vadd.f32 %v1479, %v1482
  %v1485 = vadd.f32 %v1480, %v1482
  %s1486 = scalar_lea.vmem %s14, 32
  %v1487 = vld [vmem:[%s1486] sm:$0xff]
  %v1488 = vld [vmem:[%s1486 + $0x8] sm:$0xff]
  %v1489 = vld [vmem:[%s1486 + $0x10] sm:$0xff]
  %v1490 = vld [vmem:[%s1486 + $0x18] sm:$0xff]
  %s1491 = scalar_lea.vmem %s15, 1
  %v1492 = vld [vmem:[%s1491] sm:$0x1]
  %v1494 = vperm.slane %v1492, 0
  %v1497 = vsel %vm139, %v1484, 0
  %v1500 = vsel %vm139, %v1485, 0
  %1502 = vmatpush.msra.mxu0 0.0
  %1503 = vmatpush.msra.mxu0 0.0
  %1504 = vmatpush.msra.mxu0 0.0
  %1505 = vmatpush.msra.mxu0 0.0
  %1506 = vmatpush.msra.mxu0 0.0
  %1507 = vmatpush.msra.mxu0 0.0
  %1508 = vmatpush.msra.mxu0 0.0
  %1509 = vmatpush.msra.mxu0 0.0
  %1510 = vmatpush.msra.mxu0 0.0
  %1511 = vmatpush.msra.mxu0 0.0
  %1512 = vmatpush.msra.mxu0 0.0
  %1513 = vmatpush.msra.mxu0 0.0
  %1514 = vmatpush.msra.mxu0 %v1490
  %1515 = vmatpush.msra.mxu0 %v1489
  %1516 = vmatpush.msra.mxu0 %v1488
  %1517 = vmatpush.msra.mxu0 %v1487
  %1518 = vmatmul.f32.gmra.mxu0 %v1497
  %v1519 = vpop.f32.mrf.mxu0
  %v1520 = vadd.f32 %v1494, %v1519
  %1521 = vmatmul.f32.gmra.mxu0 %v1500
  %v1522 = vpop.f32.mrf.mxu0
  %v1523 = vadd.f32 %v1494, %v1522
  %1524 = vdwg.mxu0
  %v1525 = vmul.f32 %v1520, 0.5
  %v1526 = vmul.f32 %v1523, 0.5
  %v1527 = vmul.f32 %v1520, 0.70710677
  %v1528 = vmul.f32 %v1523, 0.70710677
  %v1529 = vmul.f32 %v1527, %v1527
  %v1530 = vmin.f32 16.0, %v1529
  %v1531 = vmul.f32 %v1530, 2.1237322e-06
  %v1532 = vadd.f32 %v1531, 0.00028619796
  %v1533 = vmul.f32 %v1530, %v1532
  %v1534 = vadd.f32 %v1533, 0.0036580483
  %v1535 = vmul.f32 %v1530, %v1534
  %v1536 = vadd.f32 %v1535, 0.05243302
  %v1537 = vmul.f32 %v1530, %v1536
  %v1538 = vadd.f32 %v1537, 0.18741608
  %v1539 = vmul.f32 %v1530, %v1538
  %v1540 = vadd.f32 %v1539, 1.1283791
  %v1541 = vmul.f32 %v1527, %v1540
  %v1542 = vmul.f32 %v1530, 3.8918573e-05
  %v1543 = vadd.f32 %v1542, 0.001143296
  %v1544 = vmul.f32 %v1530, %v1543
  %v1545 = vadd.f32 %v1544, 0.014752088
  %v1546 = vmul.f32 %v1530, %v1545
  %v1547 = vadd.f32 %v1546, 0.112945676
  %v1548 = vmul.f32 %v1530, %v1547
  %v1549 = vadd.f32 %v1548, 0.4994258
  %v1550 = vmul.f32 %v1530, %v1549
  %v1551 = vadd.f32 %v1550, 1.0
  %v1552 = vrcp.pop %v1551
  %v1553 = vmul.f32 %v1551, %v1552
  %v1554 = vsub.f32 1.0, %v1553
  %v1555 = vmul.f32 %v1552, %v1554
  %v1556 = vadd.f32 %v1552, %v1555
  %vm1557 = vweird.f32 %v1551
  %vm1558 = vweird.f32 %v1552
  %vm1559 = vmor %vm1557, %vm1558
  %v1560 = vsel %vm1559, %v1552, %v1556
  %v1561 = vand.u32 2147483647, %v1551
  %vm1562 = vcmp.eq.f32.partialorder %v1561, 8.507059e+37
  %v1563 = vand.u32 %v1551, 2147483648
  %v1564 = vor.u32 1.1754944e-38, %v1563
  %v1565 = vsel %vm1562, %v1564, %v1560
  %v1566 = vmul.f32 %v1541, %v1565
  %v1567 = vmin.f32 %v1566, 1.0
  %v1568 = vmax.f32 %v1567, -1.0
  %v1569 = vmul.f32 %v1528, %v1528
  %v1570 = vmin.f32 16.0, %v1569
  %v1571 = vmul.f32 %v1570, 2.1237322e-06
  %v1572 = vadd.f32 %v1571, 0.00028619796
  %v1573 = vmul.f32 %v1570, %v1572
  %v1574 = vadd.f32 %v1573, 0.0036580483
  %v1575 = vmul.f32 %v1570, %v1574
  %v1576 = vadd.f32 %v1575, 0.05243302
  %v1577 = vmul.f32 %v1570, %v1576
  %v1578 = vadd.f32 %v1577, 0.18741608
  %v1579 = vmul.f32 %v1570, %v1578
  %v1580 = vadd.f32 %v1579, 1.1283791
  %v1581 = vmul.f32 %v1528, %v1580
  %v1582 = vmul.f32 %v1570, 3.8918573e-05
  %v1583 = vadd.f32 %v1582, 0.001143296
  %v1584 = vmul.f32 %v1570, %v1583
  %v1585 = vadd.f32 %v1584, 0.014752088
  %v1586 = vmul.f32 %v1570, %v1585
  %v1587 = vadd.f32 %v1586, 0.112945676
  %v1588 = vmul.f32 %v1570, %v1587
  %v1589 = vadd.f32 %v1588, 0.4994258
  %v1590 = vmul.f32 %v1570, %v1589
  %v1591 = vadd.f32 %v1590, 1.0
  %v1592 = vrcp.pop %v1591
  %v1593 = vmul.f32 %v1591, %v1592
  %v1594 = vsub.f32 1.0, %v1593
  %v1595 = vmul.f32 %v1592, %v1594
  %v1596 = vadd.f32 %v1592, %v1595
  %vm1597 = vweird.f32 %v1591
  %vm1598 = vweird.f32 %v1592
  %vm1599 = vmor %vm1597, %vm1598
  %v1600 = vsel %vm1599, %v1592, %v1596
  %v1601 = vand.u32 2147483647, %v1591
  %vm1602 = vcmp.eq.f32.partialorder %v1601, 8.507059e+37
  %v1603 = vand.u32 %v1591, 2147483648
  %v1604 = vor.u32 1.1754944e-38, %v1603
  %v1605 = vsel %vm1602, %v1604, %v1600
  %v1606 = vmul.f32 %v1581, %v1605
  %v1607 = vmin.f32 %v1606, 1.0
  %v1608 = vmax.f32 %v1607, -1.0
  %v1609 = vadd.f32 %v1568, 1.0
  %v1610 = vadd.f32 %v1608, 1.0
  %v1611 = vmul.f32 %v1525, %v1609
  %v1612 = vmul.f32 %v1526, %v1610
  %s1613 = scalar_lea.vmem %s16, 64
  %v1614 = vld [vmem:[%s1613] sm:$0xff]
  %v1615 = vld [vmem:[%s1613 + $0x8] sm:$0xff]
  %v1616 = vld [vmem:[%s1613 + $0x10] sm:$0xff]
  %v1617 = vld [vmem:[%s1613 + $0x18] sm:$0xff]
  %v1618 = vld [vmem:[%s1613 + $0x20] sm:$0xff]
  %v1619 = vld [vmem:[%s1613 + $0x28] sm:$0xff]
  %v1620 = vld [vmem:[%s1613 + $0x30] sm:$0xff]
  %v1621 = vld [vmem:[%s1613 + $0x38] sm:$0xff]
  %s1622 = scalar_lea.vmem %s17, 1
  %v1623 = vld [vmem:[%s1622] sm:$0x1]
  %v1625 = vperm.slane %v1623, 0
  %v1628 = vsel %vm859, %v1611, 0
  %v1631 = vsel %vm859, %v1612, 0
  %1633 = vmatpush.msra.mxu0 0.0
  %1634 = vmatpush.msra.mxu0 0.0
  %1635 = vmatpush.msra.mxu0 0.0
  %1636 = vmatpush.msra.mxu0 0.0
  %1637 = vmatpush.msra.mxu0 0.0
  %1638 = vmatpush.msra.mxu0 0.0
  %1639 = vmatpush.msra.mxu0 0.0
  %1640 = vmatpush.msra.mxu0 0.0
  %1641 = vmatpush.msra.mxu0 %v1621
  %1642 = vmatpush.msra.mxu0 %v1620
  %1643 = vmatpush.msra.mxu0 %v1619
  %1644 = vmatpush.msra.mxu0 %v1618
  %1645 = vmatpush.msra.mxu0 %v1617
  %1646 = vmatpush.msra.mxu0 %v1616
  %1647 = vmatpush.msra.mxu0 %v1615
  %1648 = vmatpush.msra.mxu0 %v1614
  %1649 = vmatmul.f32.gmra.mxu0 %v1628
  %v1650 = vpop.f32.mrf.mxu0
  %v1651 = vadd.f32 %v1625, %v1650
  %1652 = vmatmul.f32.gmra.mxu0 %v1631
  %v1653 = vpop.f32.mrf.mxu0
  %v1654 = vadd.f32 %v1625, %v1653
  %1655 = vdwg.mxu0
  %v1656 = vadd.f32 %v1651, %v1484
  %v1657 = vadd.f32 %v1654, %v1485
  %s1658 = scalar_lea.vmem %s18, 1
  %v1659 = vld [vmem:[%s1658] sm:$0x1]
  %s1660 = scalar_lea.vmem %s19, 1
  %v1661 = vld [vmem:[%s1660] sm:$0x1]
  %v1662 = vsel %vm139, %v1656, 0.0
  %1663 = vadd.xlane.f32.xlu0 %v1662
  %v1664 = vpop.xlane.xlu0 %1663
  %v1665 = vsel %vm139, %v1657, 0.0
  %1666 = vadd.xlane.f32.xlu0 %v1665
  %v1667 = vpop.xlane.xlu0 %1666
  %v1668 = vmul.f32 %v1664, %v673
  %v1669 = vmul.f32 %v1667, %v673
  %v1670 = vsub.f32 %v1656, %v1668
  %v1671 = vsub.f32 %v1657, %v1669
  %v1672 = vmul.f32 %v1670, %v1670
  %v1673 = vmul.f32 %v1671, %v1671
  %v1674 = vsel %vm139, %v1672, 0.0
  %1675 = vadd.xlane.f32.xlu0 %v1674
  %v1676 = vpop.xlane.xlu0 %1675
  %v1677 = vsel %vm139, %v1673, 0.0
  %1678 = vadd.xlane.f32.xlu0 %v1677
  %v1679 = vpop.xlane.xlu0 %1678
  %v1680 = vmul.f32 %v1676, %v673
  %v1681 = vmul.f32 %v1679, %v673
  %v1682 = vadd.f32 %v1680, 1e-12
  %v1683 = vadd.f32 %v1681, 1e-12
  %v1684 = vrsqrt.pop %v1682
  %v1685 = vmul.f32 %v1684, %v1682
  %v1686 = vmul.f32 %v1685, %v1684
  %v1687 = vmul.f32 0.5, %v1686
  %v1688 = vsub.f32 1.5, %v1687
  %v1689 = vmul.f32 %v1684, %v1688
  %vm1690 = vweird.f32 %v1682
  %vm1691 = vweird.f32 %v1684
  %vm1692 = vmor %vm1690, %vm1691
  %v1693 = vsel %vm1692, %v1684, %v1689
  %v1694 = vrsqrt.pop %v1683
  %v1695 = vmul.f32 %v1694, %v1683
  %v1696 = vmul.f32 %v1695, %v1694
  %v1697 = vmul.f32 0.5, %v1696
  %v1698 = vsub.f32 1.5, %v1697
  %v1699 = vmul.f32 %v1694, %v1698
  %vm1700 = vweird.f32 %v1683
  %vm1701 = vweird.f32 %v1694
  %vm1702 = vmor %vm1700, %vm1701
  %v1703 = vsel %vm1702, %v1694, %v1699
  %v1704 = vmul.f32 %v1670, %v1693
  %v1705 = vmul.f32 %v1671, %v1703
  %v1707 = vperm.slane %v1659, 0
  %v1709 = vmul.f32 %v1704, %v1707
  %v1710 = vmul.f32 %v1705, %v1707
  %v1712 = vperm.slane %v1661, 0
  %v1714 = vadd.f32 %v1709, %v1712
  %v1715 = vadd.f32 %v1710, %v1712
  %v1716 = vld [vmem:[%s20] sm:$0xff]
  %v1717 = vld [vmem:[%s20 + $0x8] sm:$0xff]
  %v1718 = vld [vmem:[%s20 + $0x10] sm:$0xff]
  %v1719 = vld [vmem:[%s20 + $0x18] sm:$0xff]
  %v1720 = vld [vmem:[%s21] sm:$0x1]
  %v1722 = vperm.slane %v1720, 0
  %v1725 = vsel %vm139, %v1714, 0
  %v1728 = vsel %vm139, %v1715, 0
  %1730 = vmatpush.msra.mxu0 0.0
  %1731 = vmatpush.msra.mxu0 0.0
  %1732 = vmatpush.msra.mxu0 0.0
  %1733 = vmatpush.msra.mxu0 0.0
  %1734 = vmatpush.msra.mxu0 0.0
  %1735 = vmatpush.msra.mxu0 0.0
  %1736 = vmatpush.msra.mxu0 0.0
  %1737 = vmatpush.msra.mxu0 0.0
  %1738 = vmatpush.msra.mxu0 0.0
  %1739 = vmatpush.msra.mxu0 0.0
  %1740 = vmatpush.msra.mxu0 0.0
  %1741 = vmatpush.msra.mxu0 0.0
  %1742 = vmatpush.msra.mxu0 %v1719
  %1743 = vmatpush.msra.mxu0 %v1718
  %1744 = vmatpush.msra.mxu0 %v1717
  %1745 = vmatpush.msra.mxu0 %v1716
  %1746 = vmatmul.f32.gmra.mxu0 %v1725
  %v1747 = vpop.f32.mrf.mxu0
  %v1748 = vadd.f32 %v1722, %v1747
  %1749 = vmatmul.f32.gmra.mxu0 %v1728
  %v1750 = vpop.f32.mrf.mxu0
  %v1751 = vadd.f32 %v1722, %v1750
  %1752 = vdwg.mxu0
  %v1753 = vld [vmem:[%s22] sm:$0x1]
  %v1754 = vld [vmem:[%s23] sm:$0x1]
  %v1755 = vsel %vm223, %v1748, 0.0
  %1756 = vadd.xlane.f32.xlu0 %v1755
  %v1757 = vpop.xlane.xlu0 %1756
  %v1758 = vsel %vm223, %v1751, 0.0
  %1759 = vadd.xlane.f32.xlu0 %v1758
  %v1760 = vpop.xlane.xlu0 %1759
  %v1761 = vrcp.pop 16.0
  %v1762 = vmul.f32 16.0, %v1761
  %v1763 = vsub.f32 1.0, %v1762
  %v1764 = vmul.f32 %v1761, %v1763
  %v1765 = vadd.f32 %v1761, %v1764
  %vm1766 = vweird.f32 %v1761
  %v1767 = vsel %vm1766, %v1761, %v1765
  %v1768 = vmul.f32 %v1757, %v1767
  %v1769 = vmul.f32 %v1760, %v1767
  %v1770 = vsub.f32 %v1748, %v1768
  %v1771 = vsub.f32 %v1751, %v1769
  %v1772 = vmul.f32 %v1770, %v1770
  %v1773 = vmul.f32 %v1771, %v1771
  %v1774 = vsel %vm223, %v1772, 0.0
  %1775 = vadd.xlane.f32.xlu0 %v1774
  %v1776 = vpop.xlane.xlu0 %1775
  %v1777 = vsel %vm223, %v1773, 0.0
  %1778 = vadd.xlane.f32.xlu0 %v1777
  %v1779 = vpop.xlane.xlu0 %1778
  %v1780 = vmul.f32 %v1776, %v1767
  %v1781 = vmul.f32 %v1779, %v1767
  %v1782 = vadd.f32 %v1780, 1e-05
  %v1783 = vadd.f32 %v1781, 1e-05
  %v1784 = vrsqrt.pop %v1782
  %v1785 = vmul.f32 %v1784, %v1782
  %v1786 = vmul.f32 %v1785, %v1784
  %v1787 = vmul.f32 0.5, %v1786
  %v1788 = vsub.f32 1.5, %v1787
  %v1789 = vmul.f32 %v1784, %v1788
  %vm1790 = vweird.f32 %v1782
  %vm1791 = vweird.f32 %v1784
  %vm1792 = vmor %vm1790, %vm1791
  %v1793 = vsel %vm1792, %v1784, %v1789
  %v1794 = vrsqrt.pop %v1783
  %v1795 = vmul.f32 %v1794, %v1783
  %v1796 = vmul.f32 %v1795, %v1794
  %v1797 = vmul.f32 0.5, %v1796
  %v1798 = vsub.f32 1.5, %v1797
  %v1799 = vmul.f32 %v1794, %v1798
  %vm1800 = vweird.f32 %v1783
  %vm1801 = vweird.f32 %v1794
  %vm1802 = vmor %vm1800, %vm1801
  %v1803 = vsel %vm1802, %v1794, %v1799
  %v1804 = vmul.f32 %v1770, %v1793
  %v1805 = vmul.f32 %v1771, %v1803
  %v1807 = vperm.slane %v1753, 0
  %v1809 = vmul.f32 %v1804, %v1807
  %v1810 = vmul.f32 %v1805, %v1807
  %v1812 = vperm.slane %v1754, 0
  %v1814 = vadd.f32 %v1809, %v1812
  %v1815 = vadd.f32 %v1810, %v1812
  %v1816 = vmax.f32 %v1814, 0.0
  %v1817 = vmax.f32 %v1815, 0.0
  %v1818 = vsel %vm223, %v1816, %v1748
  %v1819 = vsel %vm223, %v1817, %v1751
  %v1820 = vld [vmem:[%s24] sm:$0xff]
  %v1821 = vld [vmem:[%s24 + $0x8] sm:$0xff]
  %v1822 = vld [vmem:[%s24 + $0x10] sm:$0x3]
  %v1823 = vld [vmem:[%s25] sm:$0x1]
  %v1825 = vperm.slane %v1823, 0
  %vm1827 = vcmask 146432
  %v1829 = vsel %vm1827, %v1818, 0
  %v1832 = vsel %vm1827, %v1819, 0
  %vm1834 = vcmask 1041408
  %v1836 = vsel %vm1834, %v1822, 0
  %1838 = vmatpush.msra.mxu0 0.0
  %1839 = vmatpush.msra.mxu0 0.0
  %1840 = vmatpush.msra.mxu0 0.0
  %1841 = vmatpush.msra.mxu0 0.0
  %1842 = vmatpush.msra.mxu0 0.0
  %1843 = vmatpush.msra.mxu0 0.0
  %1844 = vmatpush.msra.mxu0 0.0
  %1845 = vmatpush.msra.mxu0 0.0
  %1846 = vmatpush.msra.mxu0 0.0
  %1847 = vmatpush.msra.mxu0 0.0
  %1848 = vmatpush.msra.mxu0 0.0
  %1849 = vmatpush.msra.mxu0 0.0
  %1850 = vmatpush.msra.mxu0 0.0
  %1851 = vmatpush.msra.mxu0 %v1836
  %1852 = vmatpush.msra.mxu0 %v1821
  %1853 = vmatpush.msra.mxu0 %v1820
  %1854 = vmatmul.f32.gmra.mxu0 %v1829
  %v1855 = vpop.f32.mrf.mxu0
  %v1856 = vadd.f32 %v1825, %v1855
  %1857 = vmatmul.f32.gmra.mxu0 %v1832
  %v1858 = vpop.f32.mrf.mxu0
  %v1859 = vadd.f32 %v1825, %v1858
  %1860 = vdwg.mxu0
  %1861 = vst [vmem:[%s26] sm:$0xff] %v1856
  %1862 = vst [vmem:[%s26 + $0x8] sm:$0xff] %v1859
  // Predicated region
  $region106: #{pallas_forward.1} parent=0 // pred_check
    _
  $region107: #{pallas_forward.1} parent=0 // pred_check_branch
    %1864 = sbr.rel (0) target = $region109
  $region108: #{pallas_forward.1} parent=0 // pred_region
    _
  $region109: #{pallas_forward.1} parent=0 // pred_fallthru
    _
  // Predicated region
  $region110: #{pallas_forward.1} parent=0 // pred_check
    _
  $region111: #{pallas_forward.1} parent=0 // pred_check_branch
    %1866 = sbr.rel (0) target = $region113
  $region112: #{pallas_forward.1} parent=0 // pred_region
    _
  $region113: #{pallas_forward.1} parent=0 // pred_fallthru
    _

</llo_original>
